<compile_context>
chip_gen: v7x
topology: tpu7x:2x2x1
jax: 0.10.0
libtpu: 0.0.40
codegen_flags: <defaults>
</compile_context>

<pallas_src>
import numpy as np
import jax
import jax.numpy as jnp
from jax.experimental import pallas as pl
from jax.experimental.pallas import tpu as pltpu


_LOG_EPS = float(np.log(1e-4))
_LOG_1M_EPS = float(np.log(1.0 - 1e-4))


# ----------------------------------------------------------------------------
# Tiling plan / layout helpers (host side, all static).
# ----------------------------------------------------------------------------
def _plan_tiles(n_rows, target_tile=1024, want_parallel=2, sublane=8):
    """Pick (tile_rows, tiles_per_super, n_super) for the row-tile grid."""
    if n_rows <= target_tile:
        tile = max(sublane, -(-n_rows // sublane) * sublane)
        return tile, 1, 1
    n_tiles = -(-n_rows // target_tile)
    n_super = want_parallel if n_tiles >= want_parallel else 1
    tiles_per_super = -(-n_tiles // n_super)
    return target_tile, tiles_per_super, n_super


def _lane_dense(x, rows_pad, dtype=jnp.float32):
    """NCHW heat -> (rows_pad, 128) lane-dense slab.

    Free reshape when B*C*H*W == rows_pad*128 (the common CornerNet shapes);
    only ragged shapes pay a pad copy.
    """
    flat = x.reshape(-1).astype(dtype)
    pad = rows_pad * 128 - flat.shape[0]
    if pad:
        flat = jnp.pad(flat, (0, pad))
    return flat.reshape(rows_pad, 128)


# ----------------------------------------------------------------------------
# Fused Pallas kernel.  Output block (1, 6*nstack+3, 8, 128) per super-tile:
#   channels [0 .. 3*nstack-1]          : merged pos+neg focal partial sums,
#                                         channel = 3*s + h
#   channels [3*nstack .. 3*nstack+2]   : num_pos per head (gt-only, shared)
#   channels [3*nstack+3 ..]            : pull, push, regr per stack (scalar
#                                         broadcast, written at finalize, p==0)
# ----------------------------------------------------------------------------
def _make_fused_kernel(nstack, tile_r, tiles_per_super, n_valid, needs_mask):
    n_pred = 3 * nstack

    def kernel(*refs):
        pred_refs = refs[:n_pred]                       # stack-major: tl, br, ct
        gt_refs = refs[n_pred:n_pred + 3]
        tags_ref, mask_ref, pregr_ref, gregr_ref, out_ref = refs[n_pred + 3:]

        p = pl.program_id(0)
        t = pl.program_id(1)
        n_t = pl.num_programs(1)

        @pl.when(t == 0)
        def _init():
            out_ref[...] = jnp.zeros_like(out_ref)

        # Ragged-tail validity mask, computed in-kernel from the static
        # element count (no extra HBM stream); only in the non-divisible case.
        if needs_mask:
            row = jax.lax.broadcasted_iota(jnp.int32, (tile_r, 128), 0)
            lane = jax.lax.broadcasted_iota(jnp.int32, (tile_r, 128), 1)
            base = (p * tiles_per_super + t) * (tile_r * 128)
            hv = ((base + row * 128 + lane) < n_valid).astype(jnp.float32)
        else:
            hv = None

        def tile_sum(v):
            # (tile_r, 128) -> (8, 128) per-lane partial; VPU-only adds.
            return jnp.sum(v.reshape(tile_r // 8, 8, 128), axis=0)

        # ---------------- focal (_sigmoid + _neg_loss) ---------------------
        # gt-derived quantities computed once per head, reused for all stacks.
        for h in range(3):
            gt = gt_refs[h][...]
            is_pos = gt == 1.0
            # NOTE: assumes gt <= 1 everywhere (true for CornerNet Gaussian
            # heatmaps); (1-gt)^4 zeroes gt==1 in the neg branch, so the
            # reference's explicit (gt < 1) mask is redundant.
            neg_w = jnp.square(jnp.square(1.0 - gt))     # (1-gt)^4, no pow
            # num_pos depends only on gt (padded gt is 0, never == 1).
            out_ref[0, n_pred + h] += tile_sum(jnp.where(is_pos, 1.0, 0.0))

            for s in range(nstack):
                x = pred_refs[3 * s + h][...].astype(jnp.float32)
                # pred        = clip(sigmoid(x), eps, 1-eps)
                # log(pred)   = clip(log_sigmoid(x),     log eps, log(1-eps))
                # log(1-pred) = clip(log_sigmoid(x) - x, log eps, log(1-eps))
                e = jnp.exp(-jnp.abs(x))
                log_sig = jnp.minimum(x, 0.0) - jnp.log(1.0 + e)
                log_p = jnp.clip(log_sig, _LOG_EPS, _LOG_1M_EPS)
                log_1mp = jnp.clip(log_sig - x, _LOG_EPS, _LOG_1M_EPS)
                # pos branch: log(pred)   * (1-pred)^2
                # neg branch: log(1-pred) * pred^2 * (1-gt)^4
                # select-before-exp -> one exp for the squared-prob factor.
                term = (jnp.where(is_pos, log_p, log_1mp * neg_w)
                        * jnp.exp(2.0 * jnp.where(is_pos, log_1mp, log_p)))
                if hv is not None:
                    term = term * hv
                out_ref[0, 3 * s + h] += tile_sum(term)

        # ---------------- AE pull/push + smooth-L1 regr (tiny) -------------
        @pl.when((t == n_t - 1) & (p == 0))
        def _finalize():
            m = mask_ref[...]                            # (B, K)
            tags = tags_ref[...]                         # (2*nstack, B, K)
            pregr = pregr_ref[...]                       # (3*nstack, B, K, 2)
            gregr = gregr_ref[...]                       # (3, B, K, 2)
            num = jnp.sum(m, axis=1, keepdims=True)      # (B, 1)
            num_all = jnp.sum(m)
            mask2 = m[:, None, :] * m[:, :, None]        # (B, K, K)
            num_e = num[:, :, None]
            num2 = (num_e - 1.0) * num_e
            base_ch = 3 * nstack + 3

            for s in range(nstack):
                t0 = tags[2 * s]
                t1 = tags[2 * s + 1]
                tmean = (t0 + t1) * 0.5
                pull = jnp.sum((jnp.square(t0 - tmean) + jnp.square(t1 - tmean))
                               / (num + 1e-4) * m)

                dist = tmean[:, None, :] - tmean[:, :, None]
                dist = jnp.maximum(1.0 - jnp.abs(dist), 0.0)
                dist = (dist - 1.0 / (num_e + 1e-4)) / (num2 + 1e-4)
                push = jnp.sum(dist * mask2)

                diff = pregr[3 * s:3 * s + 3] - gregr    # (3, B, K, 2)
                ad = jnp.abs(diff)
                sl1 = jnp.where(ad < 1.0, 0.5 * diff * diff, ad - 0.5)
                regr = jnp.sum(sl1 * m[None, :, :, None]) / (num_all + 1e-4)

                out_ref[0, base_ch + 3 * s + 0] = jnp.full((8, 128), pull,
                                                           dtype=jnp.float32)
                out_ref[0, base_ch + 3 * s + 1] = jnp.full((8, 128), push,
                                                           dtype=jnp.float32)
                out_ref[0, base_ch + 3 * s + 2] = jnp.full((8, 128), regr,
                                                           dtype=jnp.float32)

    return kernel


def _build_fused_call(heat_shape, B, K, nstack, pred_dtype=jnp.float32):
    n = int(np.prod(heat_shape))
    n_rows = -(-n // 128)
    sublane = 16 if jnp.dtype(pred_dtype).itemsize == 2 else 8
    tile_r, tiles_per_super, n_super = _plan_tiles(n_rows, sublane=sublane)
    rows_pad = tile_r * tiles_per_super * n_super
    needs_mask = (rows_pad * 128 != n)
    n_ch = 6 * nstack + 3

    kernel = _make_fused_kernel(nstack, tile_r, tiles_per_super, n, needs_mask)

    heat_spec = pl.BlockSpec((tile_r, 128),
                             lambda p, t: (p * tiles_per_super + t, 0))
    in_specs = (
        [heat_spec] * (3 * nstack)                                   # pred logits
        + [heat_spec] * 3                                            # gt heats
        + [pl.BlockSpec((2 * nstack, B, K), lambda p, t: (0, 0, 0)),        # tags
           pl.BlockSpec((B, K), lambda p, t: (0, 0)),                       # mask
           pl.BlockSpec((3 * nstack, B, K, 2), lambda p, t: (0, 0, 0, 0)),  # pred regrs
           pl.BlockSpec((3, B, K, 2), lambda p, t: (0, 0, 0, 0))])          # gt regrs
    out_spec = pl.BlockSpec((1, n_ch, 8, 128), lambda p, t: (p, 0, 0, 0))

    # Explicit scoped-VMEM budget: all double-buffered heat streams plus room
    # for the f32 elementwise temporaries of the focal math at this tile size.
    pred_bytes = tile_r * 128 * jnp.dtype(pred_dtype).itemsize
    gt_bytes = tile_r * 128 * 4
    stream_bytes = 2 * (3 * nstack * pred_bytes + 3 * gt_bytes)
    vmem_limit = int(min(max(stream_bytes + 32 * gt_bytes + (2 << 20),
                             32 << 20), 48 << 20))

    call = pl.pallas_call(
        kernel,
        out_shape=jax.ShapeDtypeStruct((n_super, n_ch, 8, 128), jnp.float32),
        grid=(n_super, tiles_per_super),
        in_specs=in_specs,
        out_specs=out_spec,
        compiler_params=pltpu.CompilerParams(
            dimension_semantics=("parallel", "arbitrary"),
            vmem_limit_bytes=vmem_limit),
    )
    return call, rows_pad


# ----------------------------------------------------------------------------
# Forward (plain-JAX glue: free reshapes, tiny stacks, single fused call)
# ----------------------------------------------------------------------------
def ae_loss_forward(outs, targets, pull_weight=1.0, push_weight=1.0,
                    regr_weight=1.0, pred_dtype=jnp.float32):
    stride = 8
    tl_heats = outs[0::stride]
    br_heats = outs[1::stride]
    ct_heats = outs[2::stride]
    tl_tags = outs[3::stride]
    br_tags = outs[4::stride]
    tl_regrs = outs[5::stride]
    br_regrs = outs[6::stride]
    ct_regrs = outs[7::stride]

    (gt_tl_heat, gt_br_heat, gt_ct_heat, gt_mask,
     gt_tl_regr, gt_br_regr, gt_ct_regr) = targets

    nstack = len(tl_heats)
    B, K = gt_mask.shape

    call, rows_pad = _build_fused_call(gt_tl_heat.shape, B, K, nstack,
                                       pred_dtype)

    # Heat slabs: pred (stack-major, heads tl/br/ct), then gt (read once).
    pred_flat = []
    for s in range(nstack):
        for h in (tl_heats[s], br_heats[s], ct_heats[s]):
            pred_flat.append(_lane_dense(h, rows_pad, pred_dtype))
    gt_flat = [_lane_dense(g, rows_pad, jnp.float32)
               for g in (gt_tl_heat, gt_br_heat, gt_ct_heat)]

    # Tiny resident tensors.
    tags_all = jnp.stack([t.reshape(B, K) for s in range(nstack)
                          for t in (tl_tags[s], br_tags[s])]).astype(jnp.float32)
    mask_f = gt_mask.astype(jnp.float32)
    pregr_all = jnp.stack([r for s in range(nstack)
                           for r in (tl_regrs[s], br_regrs[s], ct_regrs[s])]
                          ).astype(jnp.float32)
    gt_regr = jnp.stack([gt_tl_regr, gt_br_regr,
                         gt_ct_regr]).astype(jnp.float32)

    out = call(*pred_flat, *gt_flat, tags_all, mask_f, pregr_all, gt_regr)

    # Combine per-super-tile, per-lane focal partials on host (tiny).
    n_focal = 3 * nstack + 3
    focal_parts = jnp.sum(out[:, :n_focal], axis=(0, 2, 3))     # (3*nstack+3,)
    term = focal_parts[:3 * nstack].reshape(nstack, 3)          # [stack, head]
    npos = focal_parts[3 * nstack:]                             # (3,)
    npos_safe = jnp.where(npos > 0.0, npos, 1.0)
    # When num_pos == 0 the pos-term sum is identically 0, so -(pos+neg)
    # equals the reference's "-neg" fallback.
    focal = jnp.sum(jnp.where(npos[None, :] > 0.0,
                              -term / npos_safe[None, :], -term))

    fin = out[0, n_focal:, 0, 0].reshape(nstack, 3)             # pull/push/regr
    pull = pull_weight * jnp.sum(fin[:, 0])
    push = push_weight * jnp.sum(fin[:, 1])
    regr = regr_weight * jnp.sum(fin[:, 2])

    loss = (focal + pull + push + regr) / nstack
    return (loss[None], (focal / nstack)[None], (pull / nstack)[None],
            (push / nstack)[None], (regr / nstack)[None])


# ----------------------------------------------------------------------------
# Pure-JAX reference (faithful transcription of the PyTorch helpers).
# ----------------------------------------------------------------------------
def _ref_neg_loss(preds, gt):
    pos = (gt == 1.0).astype(jnp.float32)
    neg = (gt < 1.0).astype(jnp.float32)
    neg_w = (1.0 - gt) ** 4
    loss = jnp.float32(0.0)
    for pred in preds:
        pos_loss = jnp.sum(jnp.log(pred) * (1.0 - pred) ** 2 * pos)
        neg_loss = jnp.sum(jnp.log(1.0 - pred) * pred ** 2 * neg_w * neg)
        num_pos = jnp.sum(pos)
        loss = loss + jnp.where(num_pos > 0,
                                -(pos_loss + neg_loss) / num_pos, -neg_loss)
    return loss


def _ref_ae_loss(tag0, tag1, mask):
    m = mask.astype(jnp.float32)
    num = jnp.sum(m, axis=1, keepdims=True)
    tag0 = jnp.squeeze(tag0, axis=-1)
    tag1 = jnp.squeeze(tag1, axis=-1)
    tmean = (tag0 + tag1) / 2.0
    pull = (jnp.sum((tag0 - tmean) ** 2 / (num + 1e-4) * m)
            + jnp.sum((tag1 - tmean) ** 2 / (num + 1e-4) * m))
    mask2 = m[:, None, :] * m[:, :, None]
    num_e = num[:, :, None]
    num2 = (num_e - 1.0) * num_e
    dist = tmean[:, None, :] - tmean[:, :, None]
    dist = jnp.maximum(1.0 - jnp.abs(dist), 0.0)
    dist = (dist - 1.0 / (num_e + 1e-4)) / (num2 + 1e-4)
    push = jnp.sum(dist * mask2)
    return pull, push


def _ref_regr_loss(regr, gt_regr, mask):
    m = mask.astype(jnp.float32)
    num = jnp.sum(m)
    x = regr - gt_regr
    ax = jnp.abs(x)
    sl1 = jnp.where(ax < 1.0, 0.5 * x * x, ax - 0.5) * m[:, :, None]
    return jnp.sum(sl1) / (num + 1e-4)


def ref_forward(outs, targets, pull_weight=1.0, push_weight=1.0, regr_weight=1.0):
    stride = 8
    tl_heats = outs[0::stride]
    br_heats = outs[1::stride]
    ct_heats = outs[2::stride]
    tl_tags = outs[3::stride]
    br_tags = outs[4::stride]
    tl_regrs = outs[5::stride]
    br_regrs = outs[6::stride]
    ct_regrs = outs[7::stride]
    (gt_tl_heat, gt_br_heat, gt_ct_heat, gt_mask,
     gt_tl_regr, gt_br_regr, gt_ct_regr) = targets

    sig = lambda x: jnp.clip(jax.nn.sigmoid(x), 1e-4, 1.0 - 1e-4)
    tl_heats = [sig(t) for t in tl_heats]
    br_heats = [sig(b) for b in br_heats]
    ct_heats = [sig(c) for c in ct_heats]

    focal = (_ref_neg_loss(tl_heats, gt_tl_heat)
             + _ref_neg_loss(br_heats, gt_br_heat)
             + _ref_neg_loss(ct_heats, gt_ct_heat))

    pull = jnp.float32(0.0)
    push = jnp.float32(0.0)
    for t0, t1 in zip(tl_tags, br_tags):
        p, q = _ref_ae_loss(t0, t1, gt_mask)
        pull = pull + p
        push = push + q
    pull = pull_weight * pull
    push = push_weight * push

    regr = jnp.float32(0.0)
    for tr, br, cr in zip(tl_regrs, br_regrs, ct_regrs):
        regr = regr + _ref_regr_loss(tr, gt_tl_regr, gt_mask)
        regr = regr + _ref_regr_loss(br, gt_br_regr, gt_mask)
        regr = regr + _ref_regr_loss(cr, gt_ct_regr, gt_mask)
    regr = regr_weight * regr

    n = len(tl_heats)
    loss = (focal + pull + push + regr) / n
    return (loss[None], (focal / n)[None], (pull / n)[None],
            (push / n)[None], (regr / n)[None])


# ----------------------------------------------------------------------------
if __name__ == "__main__":
    key = jax.random.PRNGKey(0)
    B, C, H, W, K = 2, 4, 16, 16, 8
    nstack = 2

    keys = iter(jax.random.split(key, 64))
    nk = lambda: next(keys)

    # AELoss has no learnable parameters; its "weights" are the scalar loss
    # weights, initialized deterministically to 1.0 (as in __init__).
    pull_w = push_w = regr_w = 1.0

    outs = []
    for _ in range(nstack):
        outs += [
            jax.random.normal(nk(), (B, C, H, W), jnp.float32),  # tl_heat logits
            jax.random.normal(nk(), (B, C, H, W), jnp.float32),  # br_heat logits
            jax.random.normal(nk(), (B, C, H, W), jnp.float32),  # ct_heat logits
            jax.random.normal(nk(), (B, K, 1), jnp.float32),     # tl_tag (gathered)
            jax.random.normal(nk(), (B, K, 1), jnp.float32),     # br_tag (gathered)
            jax.random.normal(nk(), (B, K, 2), jnp.float32),     # tl_regr
            jax.random.normal(nk(), (B, K, 2), jnp.float32),     # br_regr
            jax.random.normal(nk(), (B, K, 2), jnp.float32),     # ct_regr
        ]

    def make_gt_heat(k):
        u = jax.random.uniform(k, (B, C, H, W), jnp.float32)
        return jnp.where(u > 0.97, jnp.float32(1.0), u * 0.7)  # a few exact 1.0 peaks

    gt_tl_heat = make_gt_heat(nk())
    gt_br_heat = make_gt_heat(nk())
    gt_ct_heat = make_gt_heat(nk())
    gt_mask = (jax.random.uniform(nk(), (B, K)) > 0.4).astype(jnp.float32)
    gt_mask = gt_mask.at[:, :2].set(1.0)                       # ensure valid keypoints
    gt_tl_regr = 0.5 * jax.random.normal(nk(), (B, K, 2), jnp.float32)
    gt_br_regr = 0.5 * jax.random.normal(nk(), (B, K, 2), jnp.float32)
    gt_ct_regr = 0.5 * jax.random.normal(nk(), (B, K, 2), jnp.float32)

    targets = [gt_tl_heat, gt_br_heat, gt_ct_heat, gt_mask,
               gt_tl_regr, gt_br_regr, gt_ct_regr]

    result = ae_loss_forward(outs, targets, pull_w, push_w, regr_w)
    result = jax.block_until_ready(result)

    reference = ref_forward(outs, targets, pull_w, push_w, regr_w)
    for got, want in zip(result, reference):
        np.testing.assert_allclose(np.asarray(got), np.asarray(want),
                                   rtol=2e-4, atol=1e-5)

    print("KERNEL_OK")
</pallas_src>

<mosaic_0001>
module attributes {stable_mosaic.version = 11 : i64} {
  func.func @kernel(%arg0: i32, %arg1: i32, %arg2: memref<16x128xf32, #tpu.memory_space<vmem>>, %arg3: memref<16x128xf32, #tpu.memory_space<vmem>>, %arg4: memref<16x128xf32, #tpu.memory_space<vmem>>, %arg5: memref<16x128xf32, #tpu.memory_space<vmem>>, %arg6: memref<16x128xf32, #tpu.memory_space<vmem>>, %arg7: memref<16x128xf32, #tpu.memory_space<vmem>>, %arg8: memref<16x128xf32, #tpu.memory_space<vmem>>, %arg9: memref<16x128xf32, #tpu.memory_space<vmem>>, %arg10: memref<16x128xf32, #tpu.memory_space<vmem>>, %arg11: memref<4x2x8xf32, #tpu.memory_space<vmem>>, %arg12: memref<2x8xf32, #tpu.memory_space<vmem>>, %arg13: memref<6x2x8x2xf32, #tpu.memory_space<vmem>>, %arg14: memref<3x2x8x2xf32, #tpu.memory_space<vmem>>, %arg15: memref<1x15x8x128xf32, #tpu.memory_space<vmem>>) attributes {dimension_semantics = [#tpu.dimension_semantics<parallel>, #tpu.dimension_semantics<arbitrary>], iteration_bounds = array<i64: 1, 1>, scalar_prefetch = 0 : i64, scratch_operands = 0 : i64, tpu.core_type = #tpu.core_type<tc>, window_params = [{transform_indices = @transform_0, window_bounds = array<i64: 16, 128>}, {transform_indices = @transform_1, window_bounds = array<i64: 16, 128>}, {transform_indices = @transform_2, window_bounds = array<i64: 16, 128>}, {transform_indices = @transform_3, window_bounds = array<i64: 16, 128>}, {transform_indices = @transform_4, window_bounds = array<i64: 16, 128>}, {transform_indices = @transform_5, window_bounds = array<i64: 16, 128>}, {transform_indices = @transform_6, window_bounds = array<i64: 16, 128>}, {transform_indices = @transform_7, window_bounds = array<i64: 16, 128>}, {transform_indices = @transform_8, window_bounds = array<i64: 16, 128>}, {pipeline_mode = #tpu.pipeline_mode<synchronous>, transform_indices = @transform_9, window_bounds = array<i64: 4, 2, 8>}, {pipeline_mode = #tpu.pipeline_mode<synchronous>, transform_indices = @transform_10, window_bounds = array<i64: 2, 8>}, {pipeline_mode = #tpu.pipeline_mode<synchronous>, transform_indices = @transform_11, window_bounds = array<i64: 6, 2, 8, 2>}, {pipeline_mode = #tpu.pipeline_mode<synchronous>, transform_indices = @transform_12, window_bounds = array<i64: 3, 2, 8, 2>}, {transform_indices = @transform_13, window_bounds = array<i64: 1, 15, 8, 128>}]} {
    %c0_i32 = arith.constant 0 : i32
    %0 = arith.cmpi eq, %arg1, %c0_i32 : i32
    %1 = arith.extui %0 : i1 to i32
    %c0_i32_0 = arith.constant 0 : i32
    %2 = arith.cmpi ne, %1, %c0_i32_0 : i32
    scf.if %2 {
      %cst_153 = arith.constant 0.000000e+00 : f32
      %272 = vector.broadcast %cst_153 : f32 to vector<1x15x8x128xf32>
      %c0_154 = arith.constant 0 : index
      %c0_155 = arith.constant 0 : index
      %c0_156 = arith.constant 0 : index
      %c0_157 = arith.constant 0 : index
      %273 = vector.load %arg15[%c0_154, %c0_155, %c0_156, %c0_157] : memref<1x15x8x128xf32, #tpu.memory_space<vmem>>, vector<1x15x8x128xf32>
      tpu.vector_store %arg15[%c0_154, %c0_155, %c0_156, %c0_157], %272 {strides = array<i32>} : memref<1x15x8x128xf32, #tpu.memory_space<vmem>>, vector<1x15x8x128xf32>,
    } else {
    }
    %c0 = arith.constant 0 : index
    %c0_1 = arith.constant 0 : index
    %3 = vector.load %arg8[%c0, %c0_1] : memref<16x128xf32, #tpu.memory_space<vmem>>, vector<16x128xf32>
    %cst = arith.constant 1.000000e+00 : f32
    %4 = vector.broadcast %cst : f32 to vector<16x128xf32>
    %5 = arith.cmpf oeq, %3, %4 : vector<16x128xf32>
    %cst_2 = arith.constant 1.000000e+00 : f32
    %6 = vector.broadcast %cst_2 : f32 to vector<16x128xf32>
    %7 = arith.subf %6, %3 : vector<16x128xf32>
    %8 = arith.mulf %7, %7 : vector<16x128xf32>
    %9 = arith.mulf %8, %8 : vector<16x128xf32>
    %c0_3 = arith.constant 0 : index
    %c6 = arith.constant 6 : index
    %c0_4 = arith.constant 0 : index
    %c0_5 = arith.constant 0 : index
    %10 = vector.load %arg15[%c0_3, %c6, %c0_4, %c0_5] : memref<1x15x8x128xf32, #tpu.memory_space<vmem>>, vector<1x1x8x128xf32>
    %11 = vector.shape_cast %10 : vector<1x1x8x128xf32> to vector<8x128xf32>
    %cst_6 = arith.constant 1.000000e+00 : f32
    %cst_7 = arith.constant 0.000000e+00 : f32
    %12 = vector.broadcast %cst_6 : f32 to vector<16x128xf32>
    %13 = vector.broadcast %cst_7 : f32 to vector<16x128xf32>
    %14 = arith.select %5, %12, %13 : vector<16x128xi1>, vector<16x128xf32>
    %15 = vector.shape_cast %14 : vector<16x128xf32> to vector<2x8x128xf32>
    %cst_8 = arith.constant dense<0.000000e+00> : vector<8x128xf32>
    %16 = vector.multi_reduction <add>, %15, %cst_8 [0] : vector<2x8x128xf32> to vector<8x128xf32>
    %17 = arith.addf %11, %16 : vector<8x128xf32>
    %c0_9 = arith.constant 0 : index
    %c6_10 = arith.constant 6 : index
    %c0_11 = arith.constant 0 : index
    %c0_12 = arith.constant 0 : index
    %18 = vector.load %arg15[%c0_9, %c6_10, %c0_11, %c0_12] : memref<1x15x8x128xf32, #tpu.memory_space<vmem>>, vector<1x1x8x128xf32>
    %19 = vector.shape_cast %18 : vector<1x1x8x128xf32> to vector<8x128xf32>
    %20 = vector.shape_cast %17 : vector<8x128xf32> to vector<1x1x8x128xf32>
    tpu.vector_store %arg15[%c0_9, %c6_10, %c0_11, %c0_12], %20 {strides = array<i32>} : memref<1x15x8x128xf32, #tpu.memory_space<vmem>>, vector<1x1x8x128xf32>,
    %c0_13 = arith.constant 0 : index
    %c0_14 = arith.constant 0 : index
    %21 = vector.load %arg2[%c0_13, %c0_14] : memref<16x128xf32, #tpu.memory_space<vmem>>, vector<16x128xf32>
    %22 = math.absf %21 : vector<16x128xf32>
    %cst_15 = arith.constant 0.000000e+00 : f32
    %23 = vector.broadcast %cst_15 : f32 to vector<16x128xf32>
    %24 = arith.subf %23, %22 : vector<16x128xf32>
    %25 = math.exp %24 : vector<16x128xf32>
    %cst_16 = arith.constant 0.000000e+00 : f32
    %26 = vector.broadcast %cst_16 : f32 to vector<16x128xf32>
    %27 = arith.minimumf %21, %26 : vector<16x128xf32>
    %cst_17 = arith.constant 1.000000e+00 : f32
    %28 = vector.broadcast %cst_17 : f32 to vector<16x128xf32>
    %29 = arith.addf %28, %25 : vector<16x128xf32>
    %30 = math.log %29 : vector<16x128xf32>
    %31 = arith.subf %27, %30 : vector<16x128xf32>
    %cst_18 = arith.constant -9.21034049 : f32
    %cst_19 = arith.constant -1.000050e-04 : f32
    %32 = vector.broadcast %cst_18 : f32 to vector<16x128xf32>
    %33 = arith.maximumf %32, %31 : vector<16x128xf32>
    %34 = vector.broadcast %cst_19 : f32 to vector<16x128xf32>
    %35 = arith.minimumf %34, %33 : vector<16x128xf32>
    %36 = arith.subf %31, %21 : vector<16x128xf32>
    %cst_20 = arith.constant -9.21034049 : f32
    %cst_21 = arith.constant -1.000050e-04 : f32
    %37 = vector.broadcast %cst_20 : f32 to vector<16x128xf32>
    %38 = arith.maximumf %37, %36 : vector<16x128xf32>
    %39 = vector.broadcast %cst_21 : f32 to vector<16x128xf32>
    %40 = arith.minimumf %39, %38 : vector<16x128xf32>
    %41 = arith.mulf %40, %9 : vector<16x128xf32>
    %42 = arith.select %5, %35, %41 : vector<16x128xi1>, vector<16x128xf32>
    %43 = arith.select %5, %40, %35 : vector<16x128xi1>, vector<16x128xf32>
    %cst_22 = arith.constant 2.000000e+00 : f32
    %44 = vector.broadcast %cst_22 : f32 to vector<16x128xf32>
    %45 = arith.mulf %44, %43 : vector<16x128xf32>
    %46 = math.exp %45 : vector<16x128xf32>
    %47 = arith.mulf %42, %46 : vector<16x128xf32>
    %c0_23 = arith.constant 0 : index
    %c0_24 = arith.constant 0 : index
    %c0_25 = arith.constant 0 : index
    %c0_26 = arith.constant 0 : index
    %48 = vector.load %arg15[%c0_23, %c0_24, %c0_25, %c0_26] : memref<1x15x8x128xf32, #tpu.memory_space<vmem>>, vector<1x1x8x128xf32>
    %49 = vector.shape_cast %48 : vector<1x1x8x128xf32> to vector<8x128xf32>
    %50 = vector.shape_cast %47 : vector<16x128xf32> to vector<2x8x128xf32>
    %cst_27 = arith.constant dense<0.000000e+00> : vector<8x128xf32>
    %51 = vector.multi_reduction <add>, %50, %cst_27 [0] : vector<2x8x128xf32> to vector<8x128xf32>
    %52 = arith.addf %49, %51 : vector<8x128xf32>
    %c0_28 = arith.constant 0 : index
    %c0_29 = arith.constant 0 : index
    %c0_30 = arith.constant 0 : index
    %c0_31 = arith.constant 0 : index
    %53 = vector.load %arg15[%c0_28, %c0_29, %c0_30, %c0_31] : memref<1x15x8x128xf32, #tpu.memory_space<vmem>>, vector<1x1x8x128xf32>
    %54 = vector.shape_cast %53 : vector<1x1x8x128xf32> to vector<8x128xf32>
    %55 = vector.shape_cast %52 : vector<8x128xf32> to vector<1x1x8x128xf32>
    tpu.vector_store %arg15[%c0_28, %c0_29, %c0_30, %c0_31], %55 {strides = array<i32>} : memref<1x15x8x128xf32, #tpu.memory_space<vmem>>, vector<1x1x8x128xf32>,
    %c0_32 = arith.constant 0 : index
    %c0_33 = arith.constant 0 : index
    %56 = vector.load %arg5[%c0_32, %c0_33] : memref<16x128xf32, #tpu.memory_space<vmem>>, vector<16x128xf32>
    %57 = math.absf %56 : vector<16x128xf32>
    %cst_34 = arith.constant 0.000000e+00 : f32
    %58 = vector.broadcast %cst_34 : f32 to vector<16x128xf32>
    %59 = arith.subf %58, %57 : vector<16x128xf32>
    %60 = math.exp %59 : vector<16x128xf32>
    %cst_35 = arith.constant 0.000000e+00 : f32
    %61 = vector.broadcast %cst_35 : f32 to vector<16x128xf32>
    %62 = arith.minimumf %56, %61 : vector<16x128xf32>
    %cst_36 = arith.constant 1.000000e+00 : f32
    %63 = vector.broadcast %cst_36 : f32 to vector<16x128xf32>
    %64 = arith.addf %63, %60 : vector<16x128xf32>
    %65 = math.log %64 : vector<16x128xf32>
    %66 = arith.subf %62, %65 : vector<16x128xf32>
    %cst_37 = arith.constant -9.21034049 : f32
    %cst_38 = arith.constant -1.000050e-04 : f32
    %67 = vector.broadcast %cst_37 : f32 to vector<16x128xf32>
    %68 = arith.maximumf %67, %66 : vector<16x128xf32>
    %69 = vector.broadcast %cst_38 : f32 to vector<16x128xf32>
    %70 = arith.minimumf %69, %68 : vector<16x128xf32>
    %71 = arith.subf %66, %56 : vector<16x128xf32>
    %cst_39 = arith.constant -9.21034049 : f32
    %cst_40 = arith.constant -1.000050e-04 : f32
    %72 = vector.broadcast %cst_39 : f32 to vector<16x128xf32>
    %73 = arith.maximumf %72, %71 : vector<16x128xf32>
    %74 = vector.broadcast %cst_40 : f32 to vector<16x128xf32>
    %75 = arith.minimumf %74, %73 : vector<16x128xf32>
    %76 = arith.mulf %75, %9 : vector<16x128xf32>
    %77 = arith.select %5, %70, %76 : vector<16x128xi1>, vector<16x128xf32>
    %78 = arith.select %5, %75, %70 : vector<16x128xi1>, vector<16x128xf32>
    %cst_41 = arith.constant 2.000000e+00 : f32
    %79 = vector.broadcast %cst_41 : f32 to vector<16x128xf32>
    %80 = arith.mulf %79, %78 : vector<16x128xf32>
    %81 = math.exp %80 : vector<16x128xf32>
    %82 = arith.mulf %77, %81 : vector<16x128xf32>
    %c0_42 = arith.constant 0 : index
    %c3 = arith.constant 3 : index
    %c0_43 = arith.constant 0 : index
    %c0_44 = arith.constant 0 : index
    %83 = vector.load %arg15[%c0_42, %c3, %c0_43, %c0_44] : memref<1x15x8x128xf32, #tpu.memory_space<vmem>>, vector<1x1x8x128xf32>
    %84 = vector.shape_cast %83 : vector<1x1x8x128xf32> to vector<8x128xf32>
    %85 = vector.shape_cast %82 : vector<16x128xf32> to vector<2x8x128xf32>
    %cst_45 = arith.constant dense<0.000000e+00> : vector<8x128xf32>
    %86 = vector.multi_reduction <add>, %85, %cst_45 [0] : vector<2x8x128xf32> to vector<8x128xf32>
    %87 = arith.addf %84, %86 : vector<8x128xf32>
    %c0_46 = arith.constant 0 : index
    %c3_47 = arith.constant 3 : index
    %c0_48 = arith.constant 0 : index
    %c0_49 = arith.constant 0 : index
    %88 = vector.load %arg15[%c0_46, %c3_47, %c0_48, %c0_49] : memref<1x15x8x128xf32, #tpu.memory_space<vmem>>, vector<1x1x8x128xf32>
    %89 = vector.shape_cast %88 : vector<1x1x8x128xf32> to vector<8x128xf32>
    %90 = vector.shape_cast %87 : vector<8x128xf32> to vector<1x1x8x128xf32>
    tpu.vector_store %arg15[%c0_46, %c3_47, %c0_48, %c0_49], %90 {strides = array<i32>} : memref<1x15x8x128xf32, #tpu.memory_space<vmem>>, vector<1x1x8x128xf32>,
    %c0_50 = arith.constant 0 : index
    %c0_51 = arith.constant 0 : index
    %91 = vector.load %arg9[%c0_50, %c0_51] : memref<16x128xf32, #tpu.memory_space<vmem>>, vector<16x128xf32>
    %cst_52 = arith.constant 1.000000e+00 : f32
    %92 = vector.broadcast %cst_52 : f32 to vector<16x128xf32>
    %93 = arith.cmpf oeq, %91, %92 : vector<16x128xf32>
    %cst_53 = arith.constant 1.000000e+00 : f32
    %94 = vector.broadcast %cst_53 : f32 to vector<16x128xf32>
    %95 = arith.subf %94, %91 : vector<16x128xf32>
    %96 = arith.mulf %95, %95 : vector<16x128xf32>
    %97 = arith.mulf %96, %96 : vector<16x128xf32>
    %c0_54 = arith.constant 0 : index
    %c7 = arith.constant 7 : index
    %c0_55 = arith.constant 0 : index
    %c0_56 = arith.constant 0 : index
    %98 = vector.load %arg15[%c0_54, %c7, %c0_55, %c0_56] : memref<1x15x8x128xf32, #tpu.memory_space<vmem>>, vector<1x1x8x128xf32>
    %99 = vector.shape_cast %98 : vector<1x1x8x128xf32> to vector<8x128xf32>
    %cst_57 = arith.constant 1.000000e+00 : f32
    %cst_58 = arith.constant 0.000000e+00 : f32
    %100 = vector.broadcast %cst_57 : f32 to vector<16x128xf32>
    %101 = vector.broadcast %cst_58 : f32 to vector<16x128xf32>
    %102 = arith.select %93, %100, %101 : vector<16x128xi1>, vector<16x128xf32>
    %103 = vector.shape_cast %102 : vector<16x128xf32> to vector<2x8x128xf32>
    %cst_59 = arith.constant dense<0.000000e+00> : vector<8x128xf32>
    %104 = vector.multi_reduction <add>, %103, %cst_59 [0] : vector<2x8x128xf32> to vector<8x128xf32>
    %105 = arith.addf %99, %104 : vector<8x128xf32>
    %c0_60 = arith.constant 0 : index
    %c7_61 = arith.constant 7 : index
    %c0_62 = arith.constant 0 : index
    %c0_63 = arith.constant 0 : index
    %106 = vector.load %arg15[%c0_60, %c7_61, %c0_62, %c0_63] : memref<1x15x8x128xf32, #tpu.memory_space<vmem>>, vector<1x1x8x128xf32>
    %107 = vector.shape_cast %106 : vector<1x1x8x128xf32> to vector<8x128xf32>
    %108 = vector.shape_cast %105 : vector<8x128xf32> to vector<1x1x8x128xf32>
    tpu.vector_store %arg15[%c0_60, %c7_61, %c0_62, %c0_63], %108 {strides = array<i32>} : memref<1x15x8x128xf32, #tpu.memory_space<vmem>>, vector<1x1x8x128xf32>,
    %c0_64 = arith.constant 0 : index
    %c0_65 = arith.constant 0 : index
    %109 = vector.load %arg3[%c0_64, %c0_65] : memref<16x128xf32, #tpu.memory_space<vmem>>, vector<16x128xf32>
    %110 = math.absf %109 : vector<16x128xf32>
    %cst_66 = arith.constant 0.000000e+00 : f32
    %111 = vector.broadcast %cst_66 : f32 to vector<16x128xf32>
    %112 = arith.subf %111, %110 : vector<16x128xf32>
    %113 = math.exp %112 : vector<16x128xf32>
    %cst_67 = arith.constant 0.000000e+00 : f32
    %114 = vector.broadcast %cst_67 : f32 to vector<16x128xf32>
    %115 = arith.minimumf %109, %114 : vector<16x128xf32>
    %cst_68 = arith.constant 1.000000e+00 : f32
    %116 = vector.broadcast %cst_68 : f32 to vector<16x128xf32>
    %117 = arith.addf %116, %113 : vector<16x128xf32>
    %118 = math.log %117 : vector<16x128xf32>
    %119 = arith.subf %115, %118 : vector<16x128xf32>
    %cst_69 = arith.constant -9.21034049 : f32
    %cst_70 = arith.constant -1.000050e-04 : f32
    %120 = vector.broadcast %cst_69 : f32 to vector<16x128xf32>
    %121 = arith.maximumf %120, %119 : vector<16x128xf32>
    %122 = vector.broadcast %cst_70 : f32 to vector<16x128xf32>
    %123 = arith.minimumf %122, %121 : vector<16x128xf32>
    %124 = arith.subf %119, %109 : vector<16x128xf32>
    %cst_71 = arith.constant -9.21034049 : f32
    %cst_72 = arith.constant -1.000050e-04 : f32
    %125 = vector.broadcast %cst_71 : f32 to vector<16x128xf32>
    %126 = arith.maximumf %125, %124 : vector<16x128xf32>
    %127 = vector.broadcast %cst_72 : f32 to vector<16x128xf32>
    %128 = arith.minimumf %127, %126 : vector<16x128xf32>
    %129 = arith.mulf %128, %97 : vector<16x128xf32>
    %130 = arith.select %93, %123, %129 : vector<16x128xi1>, vector<16x128xf32>
    %131 = arith.select %93, %128, %123 : vector<16x128xi1>, vector<16x128xf32>
    %cst_73 = arith.constant 2.000000e+00 : f32
    %132 = vector.broadcast %cst_73 : f32 to vector<16x128xf32>
    %133 = arith.mulf %132, %131 : vector<16x128xf32>
    %134 = math.exp %133 : vector<16x128xf32>
    %135 = arith.mulf %130, %134 : vector<16x128xf32>
    %c0_74 = arith.constant 0 : index
    %c1 = arith.constant 1 : index
    %c0_75 = arith.constant 0 : index
    %c0_76 = arith.constant 0 : index
    %136 = vector.load %arg15[%c0_74, %c1, %c0_75, %c0_76] : memref<1x15x8x128xf32, #tpu.memory_space<vmem>>, vector<1x1x8x128xf32>
    %137 = vector.shape_cast %136 : vector<1x1x8x128xf32> to vector<8x128xf32>
    %138 = vector.shape_cast %135 : vector<16x128xf32> to vector<2x8x128xf32>
    %cst_77 = arith.constant dense<0.000000e+00> : vector<8x128xf32>
    %139 = vector.multi_reduction <add>, %138, %cst_77 [0] : vector<2x8x128xf32> to vector<8x128xf32>
    %140 = arith.addf %137, %139 : vector<8x128xf32>
    %c0_78 = arith.constant 0 : index
    %c1_79 = arith.constant 1 : index
    %c0_80 = arith.constant 0 : index
    %c0_81 = arith.constant 0 : index
    %141 = vector.load %arg15[%c0_78, %c1_79, %c0_80, %c0_81] : memref<1x15x8x128xf32, #tpu.memory_space<vmem>>, vector<1x1x8x128xf32>
    %142 = vector.shape_cast %141 : vector<1x1x8x128xf32> to vector<8x128xf32>
    %143 = vector.shape_cast %140 : vector<8x128xf32> to vector<1x1x8x128xf32>
    tpu.vector_store %arg15[%c0_78, %c1_79, %c0_80, %c0_81], %143 {strides = array<i32>} : memref<1x15x8x128xf32, #tpu.memory_space<vmem>>, vector<1x1x8x128xf32>,
    %c0_82 = arith.constant 0 : index
    %c0_83 = arith.constant 0 : index
    %144 = vector.load %arg6[%c0_82, %c0_83] : memref<16x128xf32, #tpu.memory_space<vmem>>, vector<16x128xf32>
    %145 = math.absf %144 : vector<16x128xf32>
    %cst_84 = arith.constant 0.000000e+00 : f32
    %146 = vector.broadcast %cst_84 : f32 to vector<16x128xf32>
    %147 = arith.subf %146, %145 : vector<16x128xf32>
    %148 = math.exp %147 : vector<16x128xf32>
    %cst_85 = arith.constant 0.000000e+00 : f32
    %149 = vector.broadcast %cst_85 : f32 to vector<16x128xf32>
    %150 = arith.minimumf %144, %149 : vector<16x128xf32>
    %cst_86 = arith.constant 1.000000e+00 : f32
    %151 = vector.broadcast %cst_86 : f32 to vector<16x128xf32>
    %152 = arith.addf %151, %148 : vector<16x128xf32>
    %153 = math.log %152 : vector<16x128xf32>
    %154 = arith.subf %150, %153 : vector<16x128xf32>
    %cst_87 = arith.constant -9.21034049 : f32
    %cst_88 = arith.constant -1.000050e-04 : f32
    %155 = vector.broadcast %cst_87 : f32 to vector<16x128xf32>
    %156 = arith.maximumf %155, %154 : vector<16x128xf32>
    %157 = vector.broadcast %cst_88 : f32 to vector<16x128xf32>
    %158 = arith.minimumf %157, %156 : vector<16x128xf32>
    %159 = arith.subf %154, %144 : vector<16x128xf32>
    %cst_89 = arith.constant -9.21034049 : f32
    %cst_90 = arith.constant -1.000050e-04 : f32
    %160 = vector.broadcast %cst_89 : f32 to vector<16x128xf32>
    %161 = arith.maximumf %160, %159 : vector<16x128xf32>
    %162 = vector.broadcast %cst_90 : f32 to vector<16x128xf32>
    %163 = arith.minimumf %162, %161 : vector<16x128xf32>
    %164 = arith.mulf %163, %97 : vector<16x128xf32>
    %165 = arith.select %93, %158, %164 : vector<16x128xi1>, vector<16x128xf32>
    %166 = arith.select %93, %163, %158 : vector<16x128xi1>, vector<16x128xf32>
    %cst_91 = arith.constant 2.000000e+00 : f32
    %167 = vector.broadcast %cst_91 : f32 to vector<16x128xf32>
    %168 = arith.mulf %167, %166 : vector<16x128xf32>
    %169 = math.exp %168 : vector<16x128xf32>
    %170 = arith.mulf %165, %169 : vector<16x128xf32>
    %c0_92 = arith.constant 0 : index
    %c4 = arith.constant 4 : index
    %c0_93 = arith.constant 0 : index
    %c0_94 = arith.constant 0 : index
    %171 = vector.load %arg15[%c0_92, %c4, %c0_93, %c0_94] : memref<1x15x8x128xf32, #tpu.memory_space<vmem>>, vector<1x1x8x128xf32>
    %172 = vector.shape_cast %171 : vector<1x1x8x128xf32> to vector<8x128xf32>
    %173 = vector.shape_cast %170 : vector<16x128xf32> to vector<2x8x128xf32>
    %cst_95 = arith.constant dense<0.000000e+00> : vector<8x128xf32>
    %174 = vector.multi_reduction <add>, %173, %cst_95 [0] : vector<2x8x128xf32> to vector<8x128xf32>
    %175 = arith.addf %172, %174 : vector<8x128xf32>
    %c0_96 = arith.constant 0 : index
    %c4_97 = arith.constant 4 : index
    %c0_98 = arith.constant 0 : index
    %c0_99 = arith.constant 0 : index
    %176 = vector.load %arg15[%c0_96, %c4_97, %c0_98, %c0_99] : memref<1x15x8x128xf32, #tpu.memory_space<vmem>>, vector<1x1x8x128xf32>
    %177 = vector.shape_cast %176 : vector<1x1x8x128xf32> to vector<8x128xf32>
    %178 = vector.shape_cast %175 : vector<8x128xf32> to vector<1x1x8x128xf32>
    tpu.vector_store %arg15[%c0_96, %c4_97, %c0_98, %c0_99], %178 {strides = array<i32>} : memref<1x15x8x128xf32, #tpu.memory_space<vmem>>, vector<1x1x8x128xf32>,
    %c0_100 = arith.constant 0 : index
    %c0_101 = arith.constant 0 : index
    %179 = vector.load %arg10[%c0_100, %c0_101] : memref<16x128xf32, #tpu.memory_space<vmem>>, vector<16x128xf32>
    %cst_102 = arith.constant 1.000000e+00 : f32
    %180 = vector.broadcast %cst_102 : f32 to vector<16x128xf32>
    %181 = arith.cmpf oeq, %179, %180 : vector<16x128xf32>
    %cst_103 = arith.constant 1.000000e+00 : f32
    %182 = vector.broadcast %cst_103 : f32 to vector<16x128xf32>
    %183 = arith.subf %182, %179 : vector<16x128xf32>
    %184 = arith.mulf %183, %183 : vector<16x128xf32>
    %185 = arith.mulf %184, %184 : vector<16x128xf32>
    %c0_104 = arith.constant 0 : index
    %c8 = arith.constant 8 : index
    %c0_105 = arith.constant 0 : index
    %c0_106 = arith.constant 0 : index
    %186 = vector.load %arg15[%c0_104, %c8, %c0_105, %c0_106] : memref<1x15x8x128xf32, #tpu.memory_space<vmem>>, vector<1x1x8x128xf32>
    %187 = vector.shape_cast %186 : vector<1x1x8x128xf32> to vector<8x128xf32>
    %cst_107 = arith.constant 1.000000e+00 : f32
    %cst_108 = arith.constant 0.000000e+00 : f32
    %188 = vector.broadcast %cst_107 : f32 to vector<16x128xf32>
    %189 = vector.broadcast %cst_108 : f32 to vector<16x128xf32>
    %190 = arith.select %181, %188, %189 : vector<16x128xi1>, vector<16x128xf32>
    %191 = vector.shape_cast %190 : vector<16x128xf32> to vector<2x8x128xf32>
    %cst_109 = arith.constant dense<0.000000e+00> : vector<8x128xf32>
    %192 = vector.multi_reduction <add>, %191, %cst_109 [0] : vector<2x8x128xf32> to vector<8x128xf32>
    %193 = arith.addf %187, %192 : vector<8x128xf32>
    %c0_110 = arith.constant 0 : index
    %c8_111 = arith.constant 8 : index
    %c0_112 = arith.constant 0 : index
    %c0_113 = arith.constant 0 : index
    %194 = vector.load %arg15[%c0_110, %c8_111, %c0_112, %c0_113] : memref<1x15x8x128xf32, #tpu.memory_space<vmem>>, vector<1x1x8x128xf32>
    %195 = vector.shape_cast %194 : vector<1x1x8x128xf32> to vector<8x128xf32>
    %196 = vector.shape_cast %193 : vector<8x128xf32> to vector<1x1x8x128xf32>
    tpu.vector_store %arg15[%c0_110, %c8_111, %c0_112, %c0_113], %196 {strides = array<i32>} : memref<1x15x8x128xf32, #tpu.memory_space<vmem>>, vector<1x1x8x128xf32>,
    %c0_114 = arith.constant 0 : index
    %c0_115 = arith.constant 0 : index
    %197 = vector.load %arg4[%c0_114, %c0_115] : memref<16x128xf32, #tpu.memory_space<vmem>>, vector<16x128xf32>
    %198 = math.absf %197 : vector<16x128xf32>
    %cst_116 = arith.constant 0.000000e+00 : f32
    %199 = vector.broadcast %cst_116 : f32 to vector<16x128xf32>
    %200 = arith.subf %199, %198 : vector<16x128xf32>
    %201 = math.exp %200 : vector<16x128xf32>
    %cst_117 = arith.constant 0.000000e+00 : f32
    %202 = vector.broadcast %cst_117 : f32 to vector<16x128xf32>
    %203 = arith.minimumf %197, %202 : vector<16x128xf32>
    %cst_118 = arith.constant 1.000000e+00 : f32
    %204 = vector.broadcast %cst_118 : f32 to vector<16x128xf32>
    %205 = arith.addf %204, %201 : vector<16x128xf32>
    %206 = math.log %205 : vector<16x128xf32>
    %207 = arith.subf %203, %206 : vector<16x128xf32>
    %cst_119 = arith.constant -9.21034049 : f32
    %cst_120 = arith.constant -1.000050e-04 : f32
    %208 = vector.broadcast %cst_119 : f32 to vector<16x128xf32>
    %209 = arith.maximumf %208, %207 : vector<16x128xf32>
    %210 = vector.broadcast %cst_120 : f32 to vector<16x128xf32>
    %211 = arith.minimumf %210, %209 : vector<16x128xf32>
    %212 = arith.subf %207, %197 : vector<16x128xf32>
    %cst_121 = arith.constant -9.21034049 : f32
    %cst_122 = arith.constant -1.000050e-04 : f32
    %213 = vector.broadcast %cst_121 : f32 to vector<16x128xf32>
    %214 = arith.maximumf %213, %212 : vector<16x128xf32>
    %215 = vector.broadcast %cst_122 : f32 to vector<16x128xf32>
    %216 = arith.minimumf %215, %214 : vector<16x128xf32>
    %217 = arith.mulf %216, %185 : vector<16x128xf32>
    %218 = arith.select %181, %211, %217 : vector<16x128xi1>, vector<16x128xf32>
    %219 = arith.select %181, %216, %211 : vector<16x128xi1>, vector<16x128xf32>
    %cst_123 = arith.constant 2.000000e+00 : f32
    %220 = vector.broadcast %cst_123 : f32 to vector<16x128xf32>
    %221 = arith.mulf %220, %219 : vector<16x128xf32>
    %222 = math.exp %221 : vector<16x128xf32>
    %223 = arith.mulf %218, %222 : vector<16x128xf32>
    %c0_124 = arith.constant 0 : index
    %c2 = arith.constant 2 : index
    %c0_125 = arith.constant 0 : index
    %c0_126 = arith.constant 0 : index
    %224 = vector.load %arg15[%c0_124, %c2, %c0_125, %c0_126] : memref<1x15x8x128xf32, #tpu.memory_space<vmem>>, vector<1x1x8x128xf32>
    %225 = vector.shape_cast %224 : vector<1x1x8x128xf32> to vector<8x128xf32>
    %226 = vector.shape_cast %223 : vector<16x128xf32> to vector<2x8x128xf32>
    %cst_127 = arith.constant dense<0.000000e+00> : vector<8x128xf32>
    %227 = vector.multi_reduction <add>, %226, %cst_127 [0] : vector<2x8x128xf32> to vector<8x128xf32>
    %228 = arith.addf %225, %227 : vector<8x128xf32>
    %c0_128 = arith.constant 0 : index
    %c2_129 = arith.constant 2 : index
    %c0_130 = arith.constant 0 : index
    %c0_131 = arith.constant 0 : index
    %229 = vector.load %arg15[%c0_128, %c2_129, %c0_130, %c0_131] : memref<1x15x8x128xf32, #tpu.memory_space<vmem>>, vector<1x1x8x128xf32>
    %230 = vector.shape_cast %229 : vector<1x1x8x128xf32> to vector<8x128xf32>
    %231 = vector.shape_cast %228 : vector<8x128xf32> to vector<1x1x8x128xf32>
    tpu.vector_store %arg15[%c0_128, %c2_129, %c0_130, %c0_131], %231 {strides = array<i32>} : memref<1x15x8x128xf32, #tpu.memory_space<vmem>>, vector<1x1x8x128xf32>,
    %c0_132 = arith.constant 0 : index
    %c0_133 = arith.constant 0 : index
    %232 = vector.load %arg7[%c0_132, %c0_133] : memref<16x128xf32, #tpu.memory_space<vmem>>, vector<16x128xf32>
    %233 = math.absf %232 : vector<16x128xf32>
    %cst_134 = arith.constant 0.000000e+00 : f32
    %234 = vector.broadcast %cst_134 : f32 to vector<16x128xf32>
    %235 = arith.subf %234, %233 : vector<16x128xf32>
    %236 = math.exp %235 : vector<16x128xf32>
    %cst_135 = arith.constant 0.000000e+00 : f32
    %237 = vector.broadcast %cst_135 : f32 to vector<16x128xf32>
    %238 = arith.minimumf %232, %237 : vector<16x128xf32>
    %cst_136 = arith.constant 1.000000e+00 : f32
    %239 = vector.broadcast %cst_136 : f32 to vector<16x128xf32>
    %240 = arith.addf %239, %236 : vector<16x128xf32>
    %241 = math.log %240 : vector<16x128xf32>
    %242 = arith.subf %238, %241 : vector<16x128xf32>
    %cst_137 = arith.constant -9.21034049 : f32
    %cst_138 = arith.constant -1.000050e-04 : f32
    %243 = vector.broadcast %cst_137 : f32 to vector<16x128xf32>
    %244 = arith.maximumf %243, %242 : vector<16x128xf32>
    %245 = vector.broadcast %cst_138 : f32 to vector<16x128xf32>
    %246 = arith.minimumf %245, %244 : vector<16x128xf32>
    %247 = arith.subf %242, %232 : vector<16x128xf32>
    %cst_139 = arith.constant -9.21034049 : f32
    %cst_140 = arith.constant -1.000050e-04 : f32
    %248 = vector.broadcast %cst_139 : f32 to vector<16x128xf32>
    %249 = arith.maximumf %248, %247 : vector<16x128xf32>
    %250 = vector.broadcast %cst_140 : f32 to vector<16x128xf32>
    %251 = arith.minimumf %250, %249 : vector<16x128xf32>
    %252 = arith.mulf %251, %185 : vector<16x128xf32>
    %253 = arith.select %181, %246, %252 : vector<16x128xi1>, vector<16x128xf32>
    %254 = arith.select %181, %251, %246 : vector<16x128xi1>, vector<16x128xf32>
    %cst_141 = arith.constant 2.000000e+00 : f32
    %255 = vector.broadcast %cst_141 : f32 to vector<16x128xf32>
    %256 = arith.mulf %255, %254 : vector<16x128xf32>
    %257 = math.exp %256 : vector<16x128xf32>
    %258 = arith.mulf %253, %257 : vector<16x128xf32>
    %c0_142 = arith.constant 0 : index
    %c5 = arith.constant 5 : index
    %c0_143 = arith.constant 0 : index
    %c0_144 = arith.constant 0 : index
    %259 = vector.load %arg15[%c0_142, %c5, %c0_143, %c0_144] : memref<1x15x8x128xf32, #tpu.memory_space<vmem>>, vector<1x1x8x128xf32>
    %260 = vector.shape_cast %259 : vector<1x1x8x128xf32> to vector<8x128xf32>
    %261 = vector.shape_cast %258 : vector<16x128xf32> to vector<2x8x128xf32>
    %cst_145 = arith.constant dense<0.000000e+00> : vector<8x128xf32>
    %262 = vector.multi_reduction <add>, %261, %cst_145 [0] : vector<2x8x128xf32> to vector<8x128xf32>
    %263 = arith.addf %260, %262 : vector<8x128xf32>
    %c0_146 = arith.constant 0 : index
    %c5_147 = arith.constant 5 : index
    %c0_148 = arith.constant 0 : index
    %c0_149 = arith.constant 0 : index
    %264 = vector.load %arg15[%c0_146, %c5_147, %c0_148, %c0_149] : memref<1x15x8x128xf32, #tpu.memory_space<vmem>>, vector<1x1x8x128xf32>
    %265 = vector.shape_cast %264 : vector<1x1x8x128xf32> to vector<8x128xf32>
    %266 = vector.shape_cast %263 : vector<8x128xf32> to vector<1x1x8x128xf32>
    tpu.vector_store %arg15[%c0_146, %c5_147, %c0_148, %c0_149], %266 {strides = array<i32>} : memref<1x15x8x128xf32, #tpu.memory_space<vmem>>, vector<1x1x8x128xf32>,
    %c0_i32_150 = arith.constant 0 : i32
    %267 = arith.cmpi eq, %arg1, %c0_i32_150 : i32
    %c0_i32_151 = arith.constant 0 : i32
    %268 = arith.cmpi eq, %arg0, %c0_i32_151 : i32
    %269 = arith.andi %267, %268 : i1
    %270 = arith.extui %269 : i1 to i32
    %c0_i32_152 = arith.constant 0 : i32
    %271 = arith.cmpi ne, %270, %c0_i32_152 : i32
    scf.if %271 {
      %c0_153 = arith.constant 0 : index
      %c0_154 = arith.constant 0 : index
      %272 = vector.load %arg12[%c0_153, %c0_154] : memref<2x8xf32, #tpu.memory_space<vmem>>, vector<2x8xf32>
      %c0_155 = arith.constant 0 : index
      %c0_156 = arith.constant 0 : index
      %c0_157 = arith.constant 0 : index
      %273 = vector.load %arg11[%c0_155, %c0_156, %c0_157] : memref<4x2x8xf32, #tpu.memory_space<vmem>>, vector<4x2x8xf32>
      %c0_158 = arith.constant 0 : index
      %c0_159 = arith.constant 0 : index
      %c0_160 = arith.constant 0 : index
      %c0_161 = arith.constant 0 : index
      %274 = vector.load %arg13[%c0_158, %c0_159, %c0_160, %c0_161] : memref<6x2x8x2xf32, #tpu.memory_space<vmem>>, vector<6x2x8x2xf32>
      %c0_162 = arith.constant 0 : index
      %c0_163 = arith.constant 0 : index
      %c0_164 = arith.constant 0 : index
      %c0_165 = arith.constant 0 : index
      %275 = vector.load %arg14[%c0_162, %c0_163, %c0_164, %c0_165] : memref<3x2x8x2xf32, #tpu.memory_space<vmem>>, vector<3x2x8x2xf32>
      %cst_166 = arith.constant dense<0.000000e+00> : vector<2xf32>
      %276 = vector.multi_reduction <add>, %272, %cst_166 [1] : vector<2x8xf32> to vector<2xf32>
      %277 = vector.shape_cast %276 : vector<2xf32> to vector<2x1xf32>
      %278 = vector.shape_cast %272 : vector<2x8xf32> to vector<1x2x8xf32>
      %cst_167 = arith.constant dense<0.000000e+00> : vector<1xf32>
      %279 = vector.multi_reduction <add>, %278, %cst_167 [1, 2] : vector<1x2x8xf32> to vector<1xf32>
      %280 = vector.shape_cast %279 : vector<1xf32> to vector<1x1x1xf32>
      %281 = vector.extract %280[0, 0, 0] : f32 from vector<1x1x1xf32>
      %282 = vector.shape_cast %272 : vector<2x8xf32> to vector<2x1x8xf32>
      %283 = vector.shape_cast %272 : vector<2x8xf32> to vector<2x8x1xf32>
      %284 = vector.broadcast %282 : vector<2x1x8xf32> to vector<2x8x8xf32>
      %285 = vector.broadcast %283 : vector<2x8x1xf32> to vector<2x8x8xf32>
      %286 = arith.mulf %284, %285 : vector<2x8x8xf32>
      %287 = vector.shape_cast %277 : vector<2x1xf32> to vector<2x1x1xf32>
      %cst_168 = arith.constant 1.000000e+00 : f32
      %288 = vector.broadcast %cst_168 : f32 to vector<2x1x1xf32>
      %289 = arith.subf %287, %288 : vector<2x1x1xf32>
      %290 = arith.mulf %289, %287 : vector<2x1x1xf32>
      %291 = vector.extract_strided_slice %273 {offsets = [0, 0, 0], sizes = [1, 2, 8], strides = [1, 1, 1]} : vector<4x2x8xf32> to vector<1x2x8xf32>
      %292 = vector.shape_cast %291 : vector<1x2x8xf32> to vector<2x8xf32>
      %293 = vector.extract_strided_slice %273 {offsets = [1, 0, 0], sizes = [1, 2, 8], strides = [1, 1, 1]} : vector<4x2x8xf32> to vector<1x2x8xf32>
      %294 = vector.shape_cast %293 : vector<1x2x8xf32> to vector<2x8xf32>
      %295 = arith.addf %292, %294 : vector<2x8xf32>
      %cst_169 = arith.constant 5.000000e-01 : f32
      %296 = vector.broadcast %cst_169 : f32 to vector<2x8xf32>
      %297 = arith.mulf %295, %296 : vector<2x8xf32>
      %298 = arith.subf %292, %297 : vector<2x8xf32>
      %299 = arith.mulf %298, %298 : vector<2x8xf32>
      %300 = arith.subf %294, %297 : vector<2x8xf32>
      %301 = arith.mulf %300, %300 : vector<2x8xf32>
      %302 = arith.addf %299, %301 : vector<2x8xf32>
      %cst_170 = arith.constant 9.99999974E-5 : f32
      %303 = vector.broadcast %cst_170 : f32 to vector<2x1xf32>
      %304 = arith.addf %277, %303 : vector<2x1xf32>
      %305 = vector.broadcast %304 : vector<2x1xf32> to vector<2x8xf32>
      %306 = arith.divf %302, %305 : vector<2x8xf32>
      %307 = arith.mulf %306, %272 : vector<2x8xf32>
      %308 = vector.shape_cast %307 : vector<2x8xf32> to vector<1x2x8xf32>
      %cst_171 = arith.constant dense<0.000000e+00> : vector<1xf32>
      %309 = vector.multi_reduction <add>, %308, %cst_171 [1, 2] : vector<1x2x8xf32> to vector<1xf32>
      %310 = vector.shape_cast %309 : vector<1xf32> to vector<1x1x1xf32>
      %311 = vector.extract %310[0, 0, 0] : f32 from vector<1x1x1xf32>
      %312 = vector.shape_cast %297 : vector<2x8xf32> to vector<2x1x8xf32>
      %313 = vector.shape_cast %297 : vector<2x8xf32> to vector<2x8x1xf32>
      %314 = vector.broadcast %312 : vector<2x1x8xf32> to vector<2x8x8xf32>
      %315 = vector.broadcast %313 : vector<2x8x1xf32> to vector<2x8x8xf32>
      %316 = arith.subf %314, %315 : vector<2x8x8xf32>
      %317 = math.absf %316 : vector<2x8x8xf32>
      %cst_172 = arith.constant 1.000000e+00 : f32
      %318 = vector.broadcast %cst_172 : f32 to vector<2x8x8xf32>
      %319 = arith.subf %318, %317 : vector<2x8x8xf32>
      %cst_173 = arith.constant 0.000000e+00 : f32
      %320 = vector.broadcast %cst_173 : f32 to vector<2x8x8xf32>
      %321 = arith.maximumf %319, %320 : vector<2x8x8xf32>
      %cst_174 = arith.constant 9.99999974E-5 : f32
      %322 = vector.broadcast %cst_174 : f32 to vector<2x1x1xf32>
      %323 = arith.addf %287, %322 : vector<2x1x1xf32>
      %cst_175 = arith.constant 1.000000e+00 : f32
      %324 = vector.broadcast %cst_175 : f32 to vector<2x1x1xf32>
      %325 = arith.divf %324, %323 : vector<2x1x1xf32>
      %326 = vector.broadcast %325 : vector<2x1x1xf32> to vector<2x8x8xf32>
      %327 = arith.subf %321, %326 : vector<2x8x8xf32>
      %cst_176 = arith.constant 9.99999974E-5 : f32
      %328 = vector.broadcast %cst_176 : f32 to vector<2x1x1xf32>
      %329 = arith.addf %290, %328 : vector<2x1x1xf32>
      %330 = vector.broadcast %329 : vector<2x1x1xf32> to vector<2x8x8xf32>
      %331 = arith.divf %327, %330 : vector<2x8x8xf32>
      %332 = arith.mulf %331, %286 : vector<2x8x8xf32>
      %333 = vector.shape_cast %332 : vector<2x8x8xf32> to vector<1x2x8x8xf32>
      %cst_177 = arith.constant dense<0.000000e+00> : vector<1xf32>
      %334 = vector.multi_reduction <add>, %333, %cst_177 [1, 2, 3] : vector<1x2x8x8xf32> to vector<1xf32>
      %335 = vector.shape_cast %334 : vector<1xf32> to vector<1x1x1x1xf32>
      %336 = vector.extract %335[0, 0, 0, 0] : f32 from vector<1x1x1x1xf32>
      %337 = vector.extract_strided_slice %274 {offsets = [0, 0, 0, 0], sizes = [3, 2, 8, 2], strides = [1, 1, 1, 1]} : vector<6x2x8x2xf32> to vector<3x2x8x2xf32>
      %338 = arith.subf %337, %275 : vector<3x2x8x2xf32>
      %339 = math.absf %338 : vector<3x2x8x2xf32>
      %cst_178 = arith.constant 1.000000e+00 : f32
      %340 = vector.broadcast %cst_178 : f32 to vector<3x2x8x2xf32>
      %341 = arith.cmpf olt, %339, %340 : vector<3x2x8x2xf32>
      %cst_179 = arith.constant 5.000000e-01 : f32
      %342 = vector.broadcast %cst_179 : f32 to vector<3x2x8x2xf32>
      %343 = arith.mulf %342, %338 : vector<3x2x8x2xf32>
      %344 = arith.mulf %343, %338 : vector<3x2x8x2xf32>
      %cst_180 = arith.constant 5.000000e-01 : f32
      %345 = vector.broadcast %cst_180 : f32 to vector<3x2x8x2xf32>
      %346 = arith.subf %339, %345 : vector<3x2x8x2xf32>
      %347 = arith.select %341, %344, %346 : vector<3x2x8x2xi1>, vector<3x2x8x2xf32>
      %348 = vector.shape_cast %272 : vector<2x8xf32> to vector<1x2x8x1xf32>
      %349 = vector.broadcast %348 : vector<1x2x8x1xf32> to vector<3x2x8x2xf32>
      %350 = arith.mulf %347, %349 : vector<3x2x8x2xf32>
      %351 = vector.shape_cast %350 : vector<3x2x8x2xf32> to vector<1x3x2x8x2xf32>
      %cst_181 = arith.constant dense<0.000000e+00> : vector<1xf32>
      %352 = vector.multi_reduction <add>, %351, %cst_181 [1, 2, 3, 4] : vector<1x3x2x8x2xf32> to vector<1xf32>
      %353 = vector.shape_cast %352 : vector<1xf32> to vector<1x1x1x1x1xf32>
      %354 = vector.extract %353[0, 0, 0, 0, 0] : f32 from vector<1x1x1x1x1xf32>
      %cst_182 = arith.constant 9.99999974E-5 : f32
      %355 = arith.addf %281, %cst_182 : f32
      %356 = arith.divf %354, %355 : f32
      %357 = vector.broadcast %311 : f32 to vector<8x128xf32>
      %c0_183 = arith.constant 0 : index
      %c9 = arith.constant 9 : index
      %c0_184 = arith.constant 0 : index
      %c0_185 = arith.constant 0 : index
      %358 = vector.load %arg15[%c0_183, %c9, %c0_184, %c0_185] : memref<1x15x8x128xf32, #tpu.memory_space<vmem>>, vector<1x1x8x128xf32>
      %359 = vector.shape_cast %358 : vector<1x1x8x128xf32> to vector<8x128xf32>
      %360 = vector.shape_cast %357 : vector<8x128xf32> to vector<1x1x8x128xf32>
      tpu.vector_store %arg15[%c0_183, %c9, %c0_184, %c0_185], %360 {strides = array<i32>} : memref<1x15x8x128xf32, #tpu.memory_space<vmem>>, vector<1x1x8x128xf32>,
      %361 = vector.broadcast %336 : f32 to vector<8x128xf32>
      %c0_186 = arith.constant 0 : index
      %c10 = arith.constant 10 : index
      %c0_187 = arith.constant 0 : index
      %c0_188 = arith.constant 0 : index
      %362 = vector.load %arg15[%c0_186, %c10, %c0_187, %c0_188] : memref<1x15x8x128xf32, #tpu.memory_space<vmem>>, vector<1x1x8x128xf32>
      %363 = vector.shape_cast %362 : vector<1x1x8x128xf32> to vector<8x128xf32>
      %364 = vector.shape_cast %361 : vector<8x128xf32> to vector<1x1x8x128xf32>
      tpu.vector_store %arg15[%c0_186, %c10, %c0_187, %c0_188], %364 {strides = array<i32>} : memref<1x15x8x128xf32, #tpu.memory_space<vmem>>, vector<1x1x8x128xf32>,
      %365 = vector.broadcast %356 : f32 to vector<8x128xf32>
      %c0_189 = arith.constant 0 : index
      %c11 = arith.constant 11 : index
      %c0_190 = arith.constant 0 : index
      %c0_191 = arith.constant 0 : index
      %366 = vector.load %arg15[%c0_189, %c11, %c0_190, %c0_191] : memref<1x15x8x128xf32, #tpu.memory_space<vmem>>, vector<1x1x8x128xf32>
      %367 = vector.shape_cast %366 : vector<1x1x8x128xf32> to vector<8x128xf32>
      %368 = vector.shape_cast %365 : vector<8x128xf32> to vector<1x1x8x128xf32>
      tpu.vector_store %arg15[%c0_189, %c11, %c0_190, %c0_191], %368 {strides = array<i32>} : memref<1x15x8x128xf32, #tpu.memory_space<vmem>>, vector<1x1x8x128xf32>,
      %369 = vector.extract_strided_slice %273 {offsets = [2, 0, 0], sizes = [1, 2, 8], strides = [1, 1, 1]} : vector<4x2x8xf32> to vector<1x2x8xf32>
      %370 = vector.shape_cast %369 : vector<1x2x8xf32> to vector<2x8xf32>
      %371 = vector.extract_strided_slice %273 {offsets = [3, 0, 0], sizes = [1, 2, 8], strides = [1, 1, 1]} : vector<4x2x8xf32> to vector<1x2x8xf32>
      %372 = vector.shape_cast %371 : vector<1x2x8xf32> to vector<2x8xf32>
      %373 = arith.addf %370, %372 : vector<2x8xf32>
      %cst_192 = arith.constant 5.000000e-01 : f32
      %374 = vector.broadcast %cst_192 : f32 to vector<2x8xf32>
      %375 = arith.mulf %373, %374 : vector<2x8xf32>
      %376 = arith.subf %370, %375 : vector<2x8xf32>
      %377 = arith.mulf %376, %376 : vector<2x8xf32>
      %378 = arith.subf %372, %375 : vector<2x8xf32>
      %379 = arith.mulf %378, %378 : vector<2x8xf32>
      %380 = arith.addf %377, %379 : vector<2x8xf32>
      %cst_193 = arith.constant 9.99999974E-5 : f32
      %381 = vector.broadcast %cst_193 : f32 to vector<2x1xf32>
      %382 = arith.addf %277, %381 : vector<2x1xf32>
      %383 = vector.broadcast %382 : vector<2x1xf32> to vector<2x8xf32>
      %384 = arith.divf %380, %383 : vector<2x8xf32>
      %385 = arith.mulf %384, %272 : vector<2x8xf32>
      %386 = vector.shape_cast %385 : vector<2x8xf32> to vector<1x2x8xf32>
      %cst_194 = arith.constant dense<0.000000e+00> : vector<1xf32>
      %387 = vector.multi_reduction <add>, %386, %cst_194 [1, 2] : vector<1x2x8xf32> to vector<1xf32>
      %388 = vector.shape_cast %387 : vector<1xf32> to vector<1x1x1xf32>
      %389 = vector.extract %388[0, 0, 0] : f32 from vector<1x1x1xf32>
      %390 = vector.shape_cast %375 : vector<2x8xf32> to vector<2x1x8xf32>
      %391 = vector.shape_cast %375 : vector<2x8xf32> to vector<2x8x1xf32>
      %392 = vector.broadcast %390 : vector<2x1x8xf32> to vector<2x8x8xf32>
      %393 = vector.broadcast %391 : vector<2x8x1xf32> to vector<2x8x8xf32>
      %394 = arith.subf %392, %393 : vector<2x8x8xf32>
      %395 = math.absf %394 : vector<2x8x8xf32>
      %cst_195 = arith.constant 1.000000e+00 : f32
      %396 = vector.broadcast %cst_195 : f32 to vector<2x8x8xf32>
      %397 = arith.subf %396, %395 : vector<2x8x8xf32>
      %cst_196 = arith.constant 0.000000e+00 : f32
      %398 = vector.broadcast %cst_196 : f32 to vector<2x8x8xf32>
      %399 = arith.maximumf %397, %398 : vector<2x8x8xf32>
      %cst_197 = arith.constant 9.99999974E-5 : f32
      %400 = vector.broadcast %cst_197 : f32 to vector<2x1x1xf32>
      %401 = arith.addf %287, %400 : vector<2x1x1xf32>
      %cst_198 = arith.constant 1.000000e+00 : f32
      %402 = vector.broadcast %cst_198 : f32 to vector<2x1x1xf32>
      %403 = arith.divf %402, %401 : vector<2x1x1xf32>
      %404 = vector.broadcast %403 : vector<2x1x1xf32> to vector<2x8x8xf32>
      %405 = arith.subf %399, %404 : vector<2x8x8xf32>
      %cst_199 = arith.constant 9.99999974E-5 : f32
      %406 = vector.broadcast %cst_199 : f32 to vector<2x1x1xf32>
      %407 = arith.addf %290, %406 : vector<2x1x1xf32>
      %408 = vector.broadcast %407 : vector<2x1x1xf32> to vector<2x8x8xf32>
      %409 = arith.divf %405, %408 : vector<2x8x8xf32>
      %410 = arith.mulf %409, %286 : vector<2x8x8xf32>
      %411 = vector.shape_cast %410 : vector<2x8x8xf32> to vector<1x2x8x8xf32>
      %cst_200 = arith.constant dense<0.000000e+00> : vector<1xf32>
      %412 = vector.multi_reduction <add>, %411, %cst_200 [1, 2, 3] : vector<1x2x8x8xf32> to vector<1xf32>
      %413 = vector.shape_cast %412 : vector<1xf32> to vector<1x1x1x1xf32>
      %414 = vector.extract %413[0, 0, 0, 0] : f32 from vector<1x1x1x1xf32>
      %415 = vector.extract_strided_slice %274 {offsets = [3, 0, 0, 0], sizes = [3, 2, 8, 2], strides = [1, 1, 1, 1]} : vector<6x2x8x2xf32> to vector<3x2x8x2xf32>
      %416 = arith.subf %415, %275 : vector<3x2x8x2xf32>
      %417 = math.absf %416 : vector<3x2x8x2xf32>
      %cst_201 = arith.constant 1.000000e+00 : f32
      %418 = vector.broadcast %cst_201 : f32 to vector<3x2x8x2xf32>
      %419 = arith.cmpf olt, %417, %418 : vector<3x2x8x2xf32>
      %cst_202 = arith.constant 5.000000e-01 : f32
      %420 = vector.broadcast %cst_202 : f32 to vector<3x2x8x2xf32>
      %421 = arith.mulf %420, %416 : vector<3x2x8x2xf32>
      %422 = arith.mulf %421, %416 : vector<3x2x8x2xf32>
      %cst_203 = arith.constant 5.000000e-01 : f32
      %423 = vector.broadcast %cst_203 : f32 to vector<3x2x8x2xf32>
      %424 = arith.subf %417, %423 : vector<3x2x8x2xf32>
      %425 = arith.select %419, %422, %424 : vector<3x2x8x2xi1>, vector<3x2x8x2xf32>
      %426 = vector.shape_cast %272 : vector<2x8xf32> to vector<1x2x8x1xf32>
      %427 = vector.broadcast %426 : vector<1x2x8x1xf32> to vector<3x2x8x2xf32>
      %428 = arith.mulf %425, %427 : vector<3x2x8x2xf32>
      %429 = vector.shape_cast %428 : vector<3x2x8x2xf32> to vector<1x3x2x8x2xf32>
      %cst_204 = arith.constant dense<0.000000e+00> : vector<1xf32>
      %430 = vector.multi_reduction <add>, %429, %cst_204 [1, 2, 3, 4] : vector<1x3x2x8x2xf32> to vector<1xf32>
      %431 = vector.shape_cast %430 : vector<1xf32> to vector<1x1x1x1x1xf32>
      %432 = vector.extract %431[0, 0, 0, 0, 0] : f32 from vector<1x1x1x1x1xf32>
      %cst_205 = arith.constant 9.99999974E-5 : f32
      %433 = arith.addf %281, %cst_205 : f32
      %434 = arith.divf %432, %433 : f32
      %435 = vector.broadcast %389 : f32 to vector<8x128xf32>
      %c0_206 = arith.constant 0 : index
      %c12 = arith.constant 12 : index
      %c0_207 = arith.constant 0 : index
      %c0_208 = arith.constant 0 : index
      %436 = vector.load %arg15[%c0_206, %c12, %c0_207, %c0_208] : memref<1x15x8x128xf32, #tpu.memory_space<vmem>>, vector<1x1x8x128xf32>
      %437 = vector.shape_cast %436 : vector<1x1x8x128xf32> to vector<8x128xf32>
      %438 = vector.shape_cast %435 : vector<8x128xf32> to vector<1x1x8x128xf32>
      tpu.vector_store %arg15[%c0_206, %c12, %c0_207, %c0_208], %438 {strides = array<i32>} : memref<1x15x8x128xf32, #tpu.memory_space<vmem>>, vector<1x1x8x128xf32>,
      %439 = vector.broadcast %414 : f32 to vector<8x128xf32>
      %c0_209 = arith.constant 0 : index
      %c13 = arith.constant 13 : index
      %c0_210 = arith.constant 0 : index
      %c0_211 = arith.constant 0 : index
      %440 = vector.load %arg15[%c0_209, %c13, %c0_210, %c0_211] : memref<1x15x8x128xf32, #tpu.memory_space<vmem>>, vector<1x1x8x128xf32>
      %441 = vector.shape_cast %440 : vector<1x1x8x128xf32> to vector<8x128xf32>
      %442 = vector.shape_cast %439 : vector<8x128xf32> to vector<1x1x8x128xf32>
      tpu.vector_store %arg15[%c0_209, %c13, %c0_210, %c0_211], %442 {strides = array<i32>} : memref<1x15x8x128xf32, #tpu.memory_space<vmem>>, vector<1x1x8x128xf32>,
      %443 = vector.broadcast %434 : f32 to vector<8x128xf32>
      %c0_212 = arith.constant 0 : index
      %c14 = arith.constant 14 : index
      %c0_213 = arith.constant 0 : index
      %c0_214 = arith.constant 0 : index
      %444 = vector.load %arg15[%c0_212, %c14, %c0_213, %c0_214] : memref<1x15x8x128xf32, #tpu.memory_space<vmem>>, vector<1x1x8x128xf32>
      %445 = vector.shape_cast %444 : vector<1x1x8x128xf32> to vector<8x128xf32>
      %446 = vector.shape_cast %443 : vector<8x128xf32> to vector<1x1x8x128xf32>
      tpu.vector_store %arg15[%c0_212, %c14, %c0_213, %c0_214], %446 {strides = array<i32>} : memref<1x15x8x128xf32, #tpu.memory_space<vmem>>, vector<1x1x8x128xf32>,
    } else {
    }
    return
  }
  func.func @transform_0(%arg0: i32, %arg1: i32) -> (i32, i32) {
    %c1_i32 = arith.constant 1 : i32
    %0 = arith.muli %arg0, %c1_i32 : i32
    %1 = arith.addi %0, %arg1 : i32
    %c0_i32 = arith.constant 0 : i32
    %c0_i32_0 = arith.constant 0 : i32
    return %1, %c0_i32 : i32, i32
  }
  func.func @transform_1(%arg0: i32, %arg1: i32) -> (i32, i32) {
    %c1_i32 = arith.constant 1 : i32
    %0 = arith.muli %arg0, %c1_i32 : i32
    %1 = arith.addi %0, %arg1 : i32
    %c0_i32 = arith.constant 0 : i32
    %c0_i32_0 = arith.constant 0 : i32
    return %1, %c0_i32 : i32, i32
  }
  func.func @transform_2(%arg0: i32, %arg1: i32) -> (i32, i32) {
    %c1_i32 = arith.constant 1 : i32
    %0 = arith.muli %arg0, %c1_i32 : i32
    %1 = arith.addi %0, %arg1 : i32
    %c0_i32 = arith.constant 0 : i32
    %c0_i32_0 = arith.constant 0 : i32
    return %1, %c0_i32 : i32, i32
  }
  func.func @transform_3(%arg0: i32, %arg1: i32) -> (i32, i32) {
    %c1_i32 = arith.constant 1 : i32
    %0 = arith.muli %arg0, %c1_i32 : i32
    %1 = arith.addi %0, %arg1 : i32
    %c0_i32 = arith.constant 0 : i32
    %c0_i32_0 = arith.constant 0 : i32
    return %1, %c0_i32 : i32, i32
  }
  func.func @transform_4(%arg0: i32, %arg1: i32) -> (i32, i32) {
    %c1_i32 = arith.constant 1 : i32
    %0 = arith.muli %arg0, %c1_i32 : i32
    %1 = arith.addi %0, %arg1 : i32
    %c0_i32 = arith.constant 0 : i32
    %c0_i32_0 = arith.constant 0 : i32
    return %1, %c0_i32 : i32, i32
  }
  func.func @transform_5(%arg0: i32, %arg1: i32) -> (i32, i32) {
    %c1_i32 = arith.constant 1 : i32
    %0 = arith.muli %arg0, %c1_i32 : i32
    %1 = arith.addi %0, %arg1 : i32
    %c0_i32 = arith.constant 0 : i32
    %c0_i32_0 = arith.constant 0 : i32
    return %1, %c0_i32 : i32, i32
  }
  func.func @transform_6(%arg0: i32, %arg1: i32) -> (i32, i32) {
    %c1_i32 = arith.constant 1 : i32
    %0 = arith.muli %arg0, %c1_i32 : i32
    %1 = arith.addi %0, %arg1 : i32
    %c0_i32 = arith.constant 0 : i32
    %c0_i32_0 = arith.constant 0 : i32
    return %1, %c0_i32 : i32, i32
  }
  func.func @transform_7(%arg0: i32, %arg1: i32) -> (i32, i32) {
    %c1_i32 = arith.constant 1 : i32
    %0 = arith.muli %arg0, %c1_i32 : i32
    %1 = arith.addi %0, %arg1 : i32
    %c0_i32 = arith.constant 0 : i32
    %c0_i32_0 = arith.constant 0 : i32
    return %1, %c0_i32 : i32, i32
  }
  func.func @transform_8(%arg0: i32, %arg1: i32) -> (i32, i32) {
    %c1_i32 = arith.constant 1 : i32
    %0 = arith.muli %arg0, %c1_i32 : i32
    %1 = arith.addi %0, %arg1 : i32
    %c0_i32 = arith.constant 0 : i32
    %c0_i32_0 = arith.constant 0 : i32
    return %1, %c0_i32 : i32, i32
  }
  func.func @transform_9(%arg0: i32, %arg1: i32) -> (i32, i32, i32) {
    %c0_i32 = arith.constant 0 : i32
    %c0_i32_0 = arith.constant 0 : i32
    %c0_i32_1 = arith.constant 0 : i32
    %c0_i32_2 = arith.constant 0 : i32
    return %c0_i32, %c0_i32_0, %c0_i32_1 : i32, i32, i32
  }
  func.func @transform_10(%arg0: i32, %arg1: i32) -> (i32, i32) {
    %c0_i32 = arith.constant 0 : i32
    %c0_i32_0 = arith.constant 0 : i32
    %c0_i32_1 = arith.constant 0 : i32
    return %c0_i32, %c0_i32_0 : i32, i32
  }
  func.func @transform_11(%arg0: i32, %arg1: i32) -> (i32, i32, i32, i32) {
    %c0_i32 = arith.constant 0 : i32
    %c0_i32_0 = arith.constant 0 : i32
    %c0_i32_1 = arith.constant 0 : i32
    %c0_i32_2 = arith.constant 0 : i32
    %c0_i32_3 = arith.constant 0 : i32
    return %c0_i32, %c0_i32_0, %c0_i32_1, %c0_i32_2 : i32, i32, i32, i32
  }
  func.func @transform_12(%arg0: i32, %arg1: i32) -> (i32, i32, i32, i32) {
    %c0_i32 = arith.constant 0 : i32
    %c0_i32_0 = arith.constant 0 : i32
    %c0_i32_1 = arith.constant 0 : i32
    %c0_i32_2 = arith.constant 0 : i32
    %c0_i32_3 = arith.constant 0 : i32
    return %c0_i32, %c0_i32_0, %c0_i32_1, %c0_i32_2 : i32, i32, i32, i32
  }
  func.func @transform_13(%arg0: i32, %arg1: i32) -> (i32, i32, i32, i32) {
    %c0_i32 = arith.constant 0 : i32
    %c0_i32_0 = arith.constant 0 : i32
    %c0_i32_1 = arith.constant 0 : i32
    %c0_i32_2 = arith.constant 0 : i32
    return %arg0, %c0_i32, %c0_i32_0, %c0_i32_1 : i32, i32, i32, i32
  }
}

</mosaic_0001>

<llo_original>
// kernel: tpu_custom_call.1
$region0: #{tpu_custom_call.1}
  #allocation0 [shape = 'u32[]', space=smem, size = 0x4, offset = 0x4, fixed_abs, tag = 'smem constant byte address 0x4 - core index']
  #allocation1 [shape = 'u32[144,128]{1,0:T(1,128)}', space=vmem, size = 0x12000, scoped, tag = 'internal scratch']
  %s0 = inlined_call_operand.vmem [shape: f32[16,128], index: 0, kind: input, shape index: {}]
  %s1 = inlined_call_operand.vmem [shape: f32[16,128], index: 1, kind: input, shape index: {}]
  %s2 = inlined_call_operand.vmem [shape: f32[16,128], index: 2, kind: input, shape index: {}]
  %s3 = inlined_call_operand.vmem [shape: f32[16,128], index: 3, kind: input, shape index: {}]
  %s4 = inlined_call_operand.vmem [shape: f32[16,128], index: 4, kind: input, shape index: {}]
  %s5 = inlined_call_operand.vmem [shape: f32[16,128], index: 5, kind: input, shape index: {}]
  %s6 = inlined_call_operand.vmem [shape: f32[16,128], index: 6, kind: input, shape index: {}]
  %s7 = inlined_call_operand.vmem [shape: f32[16,128], index: 7, kind: input, shape index: {}]
  %s8 = inlined_call_operand.vmem [shape: f32[16,128], index: 8, kind: input, shape index: {}]
  %s9 = inlined_call_operand.vmem [shape: f32[4,2,8], index: 9, kind: input, shape index: {}]
  %s10 = inlined_call_operand.vmem [shape: f32[2,8], index: 10, kind: input, shape index: {}]
  %s11 = inlined_call_operand.vmem [shape: f32[6,2,8,2], index: 11, kind: input, shape index: {}]
  %s12 = inlined_call_operand.vmem [shape: f32[3,2,8,2], index: 12, kind: input, shape index: {}]
  %s13 = inlined_call_operand.hbm [shape: f32[1,15,8,128], index: 13, kind: output, shape index: {}]
  %s14 = sld [smem:[#allocation0]]
  $region70: #{tpu_custom_call.1} parent=0
    _
  %s16 = ssub.s32 1, %s14
  %s17 = scalar_select 0, %s16, %s14
  $region1: #{tpu_custom_call.1} parent=0
    #allocation2 [shape = 'u8[61440]{0}', space=vmem, size = 0xf000, scoped, tag = 'output window, operand 0, single buffered']
    #allocation3 [shape = 's32[1]{0}', space=sflag, size = 0x4, scoped, tag = 'scoped memory for tpu_custom_call.1']
    %18 = vsyncpa [#allocation3], 0
    // Predicated region
    $region2: #{tpu_custom_call.1} parent=1 // pred_check
      _
    $region3: #{tpu_custom_call.1} parent=1 // pred_check_branch
      %20 = sbr.rel (0) target = $region5
    $region4: #{tpu_custom_call.1} parent=1 // pred_region
      %s21 = sadd.s32 0, 0
      %s22 = smul.u32 2, %s21
      %p23 = scmp.lt.s32.totalorder %s22, 1
      %s24 = scalar_select %p23, %s22, 1
      %s25 = smul.addr %s24, 8
      %s26 = scalar_lea.vmem %s0, %s25
      %s27 = sadd.s32 0, 0
      %s28 = smul.u32 2, %s27
    $region5: #{tpu_custom_call.1} parent=1 // pred_fallthru
      _
    // Predicated region
    $region6: #{tpu_custom_call.1} parent=1 // pred_check
      _
    $region7: #{tpu_custom_call.1} parent=1 // pred_check_branch
      %30 = sbr.rel (0) target = $region9
    $region8: #{tpu_custom_call.1} parent=1 // pred_region
      %s31 = sadd.s32 0, 0
      %s32 = smul.u32 2, %s31
      %p33 = scmp.lt.s32.totalorder %s32, 1
      %s34 = scalar_select %p33, %s32, 1
      %s35 = smul.addr %s34, 8
      %s36 = scalar_lea.vmem %s1, %s35
      %s37 = sadd.s32 0, 0
      %s38 = smul.u32 2, %s37
    $region9: #{tpu_custom_call.1} parent=1 // pred_fallthru
      _
    // Predicated region
    $region10: #{tpu_custom_call.1} parent=1 // pred_check
      _
    $region11: #{tpu_custom_call.1} parent=1 // pred_check_branch
      %40 = sbr.rel (0) target = $region13
    $region12: #{tpu_custom_call.1} parent=1 // pred_region
      %s41 = sadd.s32 0, 0
      %s42 = smul.u32 2, %s41
      %p43 = scmp.lt.s32.totalorder %s42, 1
      %s44 = scalar_select %p43, %s42, 1
      %s45 = smul.addr %s44, 8
      %s46 = scalar_lea.vmem %s2, %s45
      %s47 = sadd.s32 0, 0
      %s48 = smul.u32 2, %s47
    $region13: #{tpu_custom_call.1} parent=1 // pred_fallthru
      _
    // Predicated region
    $region14: #{tpu_custom_call.1} parent=1 // pred_check
      _
    $region15: #{tpu_custom_call.1} parent=1 // pred_check_branch
      %50 = sbr.rel (0) target = $region17
    $region16: #{tpu_custom_call.1} parent=1 // pred_region
      %s51 = sadd.s32 0, 0
      %s52 = smul.u32 2, %s51
      %p53 = scmp.lt.s32.totalorder %s52, 1
      %s54 = scalar_select %p53, %s52, 1
      %s55 = smul.addr %s54, 8
      %s56 = scalar_lea.vmem %s3, %s55
      %s57 = sadd.s32 0, 0
      %s58 = smul.u32 2, %s57
    $region17: #{tpu_custom_call.1} parent=1 // pred_fallthru
      _
    // Predicated region
    $region18: #{tpu_custom_call.1} parent=1 // pred_check
      _
    $region19: #{tpu_custom_call.1} parent=1 // pred_check_branch
      %60 = sbr.rel (0) target = $region21
    $region20: #{tpu_custom_call.1} parent=1 // pred_region
      %s61 = sadd.s32 0, 0
      %s62 = smul.u32 2, %s61
      %p63 = scmp.lt.s32.totalorder %s62, 1
      %s64 = scalar_select %p63, %s62, 1
      %s65 = smul.addr %s64, 8
      %s66 = scalar_lea.vmem %s4, %s65
      %s67 = sadd.s32 0, 0
      %s68 = smul.u32 2, %s67
    $region21: #{tpu_custom_call.1} parent=1 // pred_fallthru
      _
    // Predicated region
    $region22: #{tpu_custom_call.1} parent=1 // pred_check
      _
    $region23: #{tpu_custom_call.1} parent=1 // pred_check_branch
      %70 = sbr.rel (0) target = $region25
    $region24: #{tpu_custom_call.1} parent=1 // pred_region
      %s71 = sadd.s32 0, 0
      %s72 = smul.u32 2, %s71
      %p73 = scmp.lt.s32.totalorder %s72, 1
      %s74 = scalar_select %p73, %s72, 1
      %s75 = smul.addr %s74, 8
      %s76 = scalar_lea.vmem %s5, %s75
      %s77 = sadd.s32 0, 0
      %s78 = smul.u32 2, %s77
    $region25: #{tpu_custom_call.1} parent=1 // pred_fallthru
      _
    // Predicated region
    $region26: #{tpu_custom_call.1} parent=1 // pred_check
      _
    $region27: #{tpu_custom_call.1} parent=1 // pred_check_branch
      %80 = sbr.rel (0) target = $region29
    $region28: #{tpu_custom_call.1} parent=1 // pred_region
      %s81 = sadd.s32 0, 0
      %s82 = smul.u32 2, %s81
      %p83 = scmp.lt.s32.totalorder %s82, 1
      %s84 = scalar_select %p83, %s82, 1
      %s85 = smul.addr %s84, 8
      %s86 = scalar_lea.vmem %s6, %s85
      %s87 = sadd.s32 0, 0
      %s88 = smul.u32 2, %s87
    $region29: #{tpu_custom_call.1} parent=1 // pred_fallthru
      _
    // Predicated region
    $region30: #{tpu_custom_call.1} parent=1 // pred_check
      _
    $region31: #{tpu_custom_call.1} parent=1 // pred_check_branch
      %90 = sbr.rel (0) target = $region33
    $region32: #{tpu_custom_call.1} parent=1 // pred_region
      %s91 = sadd.s32 0, 0
      %s92 = smul.u32 2, %s91
      %p93 = scmp.lt.s32.totalorder %s92, 1
      %s94 = scalar_select %p93, %s92, 1
      %s95 = smul.addr %s94, 8
      %s96 = scalar_lea.vmem %s7, %s95
      %s97 = sadd.s32 0, 0
      %s98 = smul.u32 2, %s97
    $region33: #{tpu_custom_call.1} parent=1 // pred_fallthru
      _
    // Predicated region
    $region34: #{tpu_custom_call.1} parent=1 // pred_check
      _
    $region35: #{tpu_custom_call.1} parent=1 // pred_check_branch
      %100 = sbr.rel (0) target = $region37
    $region36: #{tpu_custom_call.1} parent=1 // pred_region
      %s101 = sadd.s32 0, 0
      %s102 = smul.u32 2, %s101
      %p103 = scmp.lt.s32.totalorder %s102, 1
      %s104 = scalar_select %p103, %s102, 1
      %s105 = smul.addr %s104, 8
      %s106 = scalar_lea.vmem %s8, %s105
      %s107 = sadd.s32 0, 0
      %s108 = smul.u32 2, %s107
    $region37: #{tpu_custom_call.1} parent=1 // pred_fallthru
      _
    // Predicated region
    $region38: #{tpu_custom_call.1} parent=1 // pred_check
      _
    $region39: #{tpu_custom_call.1} parent=1 // pred_check_branch
      %110 = sbr.rel (0) target = $region41
    $region40: #{tpu_custom_call.1} parent=1 // pred_region
      _
    $region41: #{tpu_custom_call.1} parent=1 // pred_fallthru
      _
    // Predicated region
    $region42: #{tpu_custom_call.1} parent=1 // pred_check
      _
    $region43: #{tpu_custom_call.1} parent=1 // pred_check_branch
      %112 = sbr.rel (0) target = $region45
    $region44: #{tpu_custom_call.1} parent=1 // pred_region
      _
    $region45: #{tpu_custom_call.1} parent=1 // pred_fallthru
      _
    // Predicated region
    $region46: #{tpu_custom_call.1} parent=1 // pred_check
      _
    $region47: #{tpu_custom_call.1} parent=1 // pred_check_branch
      %114 = sbr.rel (0) target = $region49
    $region48: #{tpu_custom_call.1} parent=1 // pred_region
      _
    $region49: #{tpu_custom_call.1} parent=1 // pred_fallthru
      _
    // Predicated region
    $region50: #{tpu_custom_call.1} parent=1 // pred_check
      _
    $region51: #{tpu_custom_call.1} parent=1 // pred_check_branch
      %116 = sbr.rel (0) target = $region53
    $region52: #{tpu_custom_call.1} parent=1 // pred_region
      _
    $region53: #{tpu_custom_call.1} parent=1 // pred_fallthru
      _
    %s117 = sadd.s32 0, 0
    %s118 = smul.u32 2, %s117
    %p119 = scmp.lt.s32.totalorder %s118, 1
    %s120 = scalar_select %p119, %s118, 1
    %s121 = smul.addr %s120, 8
    %s122 = scalar_lea.vmem %s0, %s121
    %s123 = sadd.s32 0, 0
    %s124 = smul.u32 2, %s123
    %p125 = scmp.lt.s32.totalorder %s124, 1
    %s126 = scalar_select %p125, %s124, 1
    %s127 = smul.addr %s126, 8
    %s128 = scalar_lea.vmem %s1, %s127
    %s129 = sadd.s32 0, 0
    %s130 = smul.u32 2, %s129
    %p131 = scmp.lt.s32.totalorder %s130, 1
    %s132 = scalar_select %p131, %s130, 1
    %s133 = smul.addr %s132, 8
    %s134 = scalar_lea.vmem %s2, %s133
    %s135 = sadd.s32 0, 0
    %s136 = smul.u32 2, %s135
    %p137 = scmp.lt.s32.totalorder %s136, 1
    %s138 = scalar_select %p137, %s136, 1
    %s139 = smul.addr %s138, 8
    %s140 = scalar_lea.vmem %s3, %s139
    %s141 = sadd.s32 0, 0
    %s142 = smul.u32 2, %s141
    %p143 = scmp.lt.s32.totalorder %s142, 1
    %s144 = scalar_select %p143, %s142, 1
    %s145 = smul.addr %s144, 8
    %s146 = scalar_lea.vmem %s4, %s145
    %s147 = sadd.s32 0, 0
    %s148 = smul.u32 2, %s147
    %p149 = scmp.lt.s32.totalorder %s148, 1
    %s150 = scalar_select %p149, %s148, 1
    %s151 = smul.addr %s150, 8
    %s152 = scalar_lea.vmem %s5, %s151
    %s153 = sadd.s32 0, 0
    %s154 = smul.u32 2, %s153
    %p155 = scmp.lt.s32.totalorder %s154, 1
    %s156 = scalar_select %p155, %s154, 1
    %s157 = smul.addr %s156, 8
    %s158 = scalar_lea.vmem %s6, %s157
    %s159 = sadd.s32 0, 0
    %s160 = smul.u32 2, %s159
    %p161 = scmp.lt.s32.totalorder %s160, 1
    %s162 = scalar_select %p161, %s160, 1
    %s163 = smul.addr %s162, 8
    %s164 = scalar_lea.vmem %s7, %s163
    %s165 = sadd.s32 0, 0
    %s166 = smul.u32 2, %s165
    %p167 = scmp.lt.s32.totalorder %s166, 1
    %s168 = scalar_select %p167, %s166, 1
    %s169 = smul.addr %s168, 8
    %s170 = scalar_lea.vmem %s8, %s169
    %s171 = sadd.s32 0, 0
    %s172 = smul.u32 2, %s171
    %p173 = scmp.lt.s32.totalorder %s172, 1
    %s174 = scalar_select %p173, %s172, 1
    %s175 = smul.addr %s174, 8
    %s176 = scalar_lea.vmem %s0, %s175
    %s177 = sadd.s32 0, 0
    %s178 = smul.u32 2, %s177
    %s179 = sadd.s32 0, 0
    %s180 = smul.u32 2, %s179
    %p181 = scmp.lt.s32.totalorder %s180, 1
    %s182 = scalar_select %p181, %s180, 1
    %s183 = smul.addr %s182, 8
    %s184 = scalar_lea.vmem %s1, %s183
    %s185 = sadd.s32 0, 0
    %s186 = smul.u32 2, %s185
    %s187 = sadd.s32 0, 0
    %s188 = smul.u32 2, %s187
    %p189 = scmp.lt.s32.totalorder %s188, 1
    %s190 = scalar_select %p189, %s188, 1
    %s191 = smul.addr %s190, 8
    %s192 = scalar_lea.vmem %s2, %s191
    %s193 = sadd.s32 0, 0
    %s194 = smul.u32 2, %s193
    %s195 = sadd.s32 0, 0
    %s196 = smul.u32 2, %s195
    %p197 = scmp.lt.s32.totalorder %s196, 1
    %s198 = scalar_select %p197, %s196, 1
    %s199 = smul.addr %s198, 8
    %s200 = scalar_lea.vmem %s3, %s199
    %s201 = sadd.s32 0, 0
    %s202 = smul.u32 2, %s201
    %s203 = sadd.s32 0, 0
    %s204 = smul.u32 2, %s203
    %p205 = scmp.lt.s32.totalorder %s204, 1
    %s206 = scalar_select %p205, %s204, 1
    %s207 = smul.addr %s206, 8
    %s208 = scalar_lea.vmem %s4, %s207
    %s209 = sadd.s32 0, 0
    %s210 = smul.u32 2, %s209
    %s211 = sadd.s32 0, 0
    %s212 = smul.u32 2, %s211
    %p213 = scmp.lt.s32.totalorder %s212, 1
    %s214 = scalar_select %p213, %s212, 1
    %s215 = smul.addr %s214, 8
    %s216 = scalar_lea.vmem %s5, %s215
    %s217 = sadd.s32 0, 0
    %s218 = smul.u32 2, %s217
    %s219 = sadd.s32 0, 0
    %s220 = smul.u32 2, %s219
    %p221 = scmp.lt.s32.totalorder %s220, 1
    %s222 = scalar_select %p221, %s220, 1
    %s223 = smul.addr %s222, 8
    %s224 = scalar_lea.vmem %s6, %s223
    %s225 = sadd.s32 0, 0
    %s226 = smul.u32 2, %s225
    %s227 = sadd.s32 0, 0
    %s228 = smul.u32 2, %s227
    %p229 = scmp.lt.s32.totalorder %s228, 1
    %s230 = scalar_select %p229, %s228, 1
    %s231 = smul.addr %s230, 8
    %s232 = scalar_lea.vmem %s7, %s231
    %s233 = sadd.s32 0, 0
    %s234 = smul.u32 2, %s233
    %s235 = sadd.s32 0, 0
    %s236 = smul.u32 2, %s235
    %p237 = scmp.lt.s32.totalorder %s236, 1
    %s238 = scalar_select %p237, %s236, 1
    %s239 = smul.addr %s238, 8
    %s240 = scalar_lea.vmem %s8, %s239
    %s241 = sadd.s32 0, 0
    %s242 = smul.u32 2, %s241
    %p243 = scmp.eq.s32.totalorder 0, 0
    // Predicated region
    $region54: #{tpu_custom_call.1} parent=1 // pred_check
      %p244 = pneg %p243
    $region55: #{tpu_custom_call.1} parent=1 // pred_check_branch
      %246 = sbr.rel (%p244) target = $region57
    $region56: #{tpu_custom_call.1} parent=1 // pred_region
      %247 = vst [vmem:[#allocation2] sm:$0xff] 0.0
      %248 = vst [vmem:[#allocation2 + $0x8] sm:$0xff] 0.0
      %249 = vst [vmem:[#allocation2 + $0x10] sm:$0xff] 0.0
      %250 = vst [vmem:[#allocation2 + $0x18] sm:$0xff] 0.0
      %251 = vst [vmem:[#allocation2 + $0x20] sm:$0xff] 0.0
      %252 = vst [vmem:[#allocation2 + $0x28] sm:$0xff] 0.0
      %253 = vst [vmem:[#allocation2 + $0x30] sm:$0xff] 0.0
      %254 = vst [vmem:[#allocation2 + $0x38] sm:$0xff] 0.0
      %255 = vst [vmem:[#allocation2 + $0x40] sm:$0xff] 0.0
      %256 = vst [vmem:[#allocation2 + $0x48] sm:$0xff] 0.0
      %257 = vst [vmem:[#allocation2 + $0x50] sm:$0xff] 0.0
      %258 = vst [vmem:[#allocation2 + $0x58] sm:$0xff] 0.0
      %259 = vst [vmem:[#allocation2 + $0x60] sm:$0xff] 0.0
      %260 = vst [vmem:[#allocation2 + $0x68] sm:$0xff] 0.0
      %261 = vst [vmem:[#allocation2 + $0x70] sm:$0xff] 0.0
    $region57: #{tpu_custom_call.1} parent=1 // pred_fallthru
      _
    %v262 = vld [vmem:[%s224] sm:$0xff]
    %v263 = vld [vmem:[%s224 + $0x8] sm:$0xff]
    %vm264 = vcmp.eq.f32.partialorder %v262, 1.0
    %vm265 = vcmp.eq.f32.partialorder %v263, 1.0
    %v266 = vsub.f32 1.0, %v262
    %v267 = vsub.f32 1.0, %v263
    %v268 = vmul.f32 %v266, %v266
    %v269 = vmul.f32 %v267, %v267
    %v270 = vmul.f32 %v268, %v268
    %v271 = vmul.f32 %v269, %v269
    %s272 = scalar_lea.vmem [#allocation2], 48
    %v273 = vld [vmem:[%s272] sm:$0xff]
    %v274 = vsel %vm264, 1.0, 0.0
    %v275 = vsel %vm265, 1.0, 0.0
    %v276 = vadd.f32 %v274, %v275
    %v277 = vadd.f32 %v273, %v276
    %278 = vst [vmem:[%s272] sm:$0xff] %v277
    %v279 = vld [vmem:[%s176] sm:$0xff]
    %v280 = vld [vmem:[%s176 + $0x8] sm:$0xff]
    %v281 = vand.u32 2147483647, %v279
    %v282 = vand.u32 2147483647, %v280
    %v283 = vsub.f32 0.0, %v281
    %v284 = vsub.f32 0.0, %v282
    %v285 = vmul.f32 %v283, 1.442695
    %v286 = vpow.pop %v285
    %v287 = vmul.f32 %v284, 1.442695
    %v288 = vpow.pop %v287
    %v289 = vmin.f32 %v279, 0.0
    %v290 = vmin.f32 %v280, 0.0
    %v291 = vadd.f32 %v286, 1.0
    %v292 = vadd.f32 %v288, 1.0
    %v293 = vlog2.pop %v291
    %v294 = vmul.f32 %v293, 0.6931472
    %v295 = vlog2.pop %v292
    %v296 = vmul.f32 %v295, 0.6931472
    %v297 = vsub.f32 %v289, %v294
    %v298 = vsub.f32 %v290, %v296
    %v299 = vmax.f32 %v297, -9.2103405
    %v300 = vmax.f32 %v298, -9.2103405
    %v301 = vmin.f32 %v299, -0.000100005
    %v302 = vmin.f32 %v300, -0.000100005
    %v303 = vsub.f32 %v297, %v279
    %v304 = vsub.f32 %v298, %v280
    %v305 = vmax.f32 %v303, -9.2103405
    %v306 = vmax.f32 %v304, -9.2103405
    %v307 = vmin.f32 %v305, -0.000100005
    %v308 = vmin.f32 %v306, -0.000100005
    %v309 = vmul.f32 %v307, %v270
    %v310 = vmul.f32 %v308, %v271
    %v311 = vsel %vm264, %v301, %v309
    %v312 = vsel %vm265, %v302, %v310
    %v313 = vsel %vm264, %v307, %v301
    %v314 = vsel %vm265, %v308, %v302
    %v315 = vmul.f32 %v313, 2.0
    %v316 = vmul.f32 %v314, 2.0
    %v317 = vmul.f32 %v315, 1.442695
    %v318 = vpow.pop %v317
    %v319 = vmul.f32 %v316, 1.442695
    %v320 = vpow.pop %v319
    %v321 = vmul.f32 %v311, %v318
    %v322 = vmul.f32 %v312, %v320
    %v323 = vld [vmem:[#allocation2] sm:$0xff]
    %v324 = vadd.f32 %v321, %v322
    %v325 = vadd.f32 %v323, %v324
    %326 = vst [vmem:[#allocation2] sm:$0xff] %v325
    %v327 = vld [vmem:[%s200] sm:$0xff]
    %v328 = vld [vmem:[%s200 + $0x8] sm:$0xff]
    %v329 = vand.u32 2147483647, %v327
    %v330 = vand.u32 2147483647, %v328
    %v331 = vsub.f32 0.0, %v329
    %v332 = vsub.f32 0.0, %v330
    %v333 = vmul.f32 %v331, 1.442695
    %v334 = vpow.pop %v333
    %v335 = vmul.f32 %v332, 1.442695
    %v336 = vpow.pop %v335
    %v337 = vmin.f32 %v327, 0.0
    %v338 = vmin.f32 %v328, 0.0
    %v339 = vadd.f32 %v334, 1.0
    %v340 = vadd.f32 %v336, 1.0
    %v341 = vlog2.pop %v339
    %v342 = vmul.f32 %v341, 0.6931472
    %v343 = vlog2.pop %v340
    %v344 = vmul.f32 %v343, 0.6931472
    %v345 = vsub.f32 %v337, %v342
    %v346 = vsub.f32 %v338, %v344
    %v347 = vmax.f32 %v345, -9.2103405
    %v348 = vmax.f32 %v346, -9.2103405
    %v349 = vmin.f32 %v347, -0.000100005
    %v350 = vmin.f32 %v348, -0.000100005
    %v351 = vsub.f32 %v345, %v327
    %v352 = vsub.f32 %v346, %v328
    %v353 = vmax.f32 %v351, -9.2103405
    %v354 = vmax.f32 %v352, -9.2103405
    %v355 = vmin.f32 %v353, -0.000100005
    %v356 = vmin.f32 %v354, -0.000100005
    %v357 = vmul.f32 %v355, %v270
    %v358 = vmul.f32 %v356, %v271
    %v359 = vsel %vm264, %v349, %v357
    %v360 = vsel %vm265, %v350, %v358
    %v361 = vsel %vm264, %v355, %v349
    %v362 = vsel %vm265, %v356, %v350
    %v363 = vmul.f32 %v361, 2.0
    %v364 = vmul.f32 %v362, 2.0
    %v365 = vmul.f32 %v363, 1.442695
    %v366 = vpow.pop %v365
    %v367 = vmul.f32 %v364, 1.442695
    %v368 = vpow.pop %v367
    %v369 = vmul.f32 %v359, %v366
    %v370 = vmul.f32 %v360, %v368
    %s371 = scalar_lea.vmem [#allocation2], 24
    %v372 = vld [vmem:[%s371] sm:$0xff]
    %v373 = vadd.f32 %v369, %v370
    %v374 = vadd.f32 %v372, %v373
    %375 = vst [vmem:[%s371] sm:$0xff] %v374
    %v376 = vld [vmem:[%s232] sm:$0xff]
    %v377 = vld [vmem:[%s232 + $0x8] sm:$0xff]
    %vm378 = vcmp.eq.f32.partialorder %v376, 1.0
    %vm379 = vcmp.eq.f32.partialorder %v377, 1.0
    %v380 = vsub.f32 1.0, %v376
    %v381 = vsub.f32 1.0, %v377
    %v382 = vmul.f32 %v380, %v380
    %v383 = vmul.f32 %v381, %v381
    %v384 = vmul.f32 %v382, %v382
    %v385 = vmul.f32 %v383, %v383
    %s386 = scalar_lea.vmem [#allocation2], 56
    %v387 = vld [vmem:[%s386] sm:$0xff]
    %v388 = vsel %vm378, 1.0, 0.0
    %v389 = vsel %vm379, 1.0, 0.0
    %v390 = vadd.f32 %v388, %v389
    %v391 = vadd.f32 %v387, %v390
    %392 = vst [vmem:[%s386] sm:$0xff] %v391
    %v393 = vld [vmem:[%s184] sm:$0xff]
    %v394 = vld [vmem:[%s184 + $0x8] sm:$0xff]
    %v395 = vand.u32 2147483647, %v393
    %v396 = vand.u32 2147483647, %v394
    %v397 = vsub.f32 0.0, %v395
    %v398 = vsub.f32 0.0, %v396
    %v399 = vmul.f32 %v397, 1.442695
    %v400 = vpow.pop %v399
    %v401 = vmul.f32 %v398, 1.442695
    %v402 = vpow.pop %v401
    %v403 = vmin.f32 %v393, 0.0
    %v404 = vmin.f32 %v394, 0.0
    %v405 = vadd.f32 %v400, 1.0
    %v406 = vadd.f32 %v402, 1.0
    %v407 = vlog2.pop %v405
    %v408 = vmul.f32 %v407, 0.6931472
    %v409 = vlog2.pop %v406
    %v410 = vmul.f32 %v409, 0.6931472
    %v411 = vsub.f32 %v403, %v408
    %v412 = vsub.f32 %v404, %v410
    %v413 = vmax.f32 %v411, -9.2103405
    %v414 = vmax.f32 %v412, -9.2103405
    %v415 = vmin.f32 %v413, -0.000100005
    %v416 = vmin.f32 %v414, -0.000100005
    %v417 = vsub.f32 %v411, %v393
    %v418 = vsub.f32 %v412, %v394
    %v419 = vmax.f32 %v417, -9.2103405
    %v420 = vmax.f32 %v418, -9.2103405
    %v421 = vmin.f32 %v419, -0.000100005
    %v422 = vmin.f32 %v420, -0.000100005
    %v423 = vmul.f32 %v421, %v384
    %v424 = vmul.f32 %v422, %v385
    %v425 = vsel %vm378, %v415, %v423
    %v426 = vsel %vm379, %v416, %v424
    %v427 = vsel %vm378, %v421, %v415
    %v428 = vsel %vm379, %v422, %v416
    %v429 = vmul.f32 %v427, 2.0
    %v430 = vmul.f32 %v428, 2.0
    %v431 = vmul.f32 %v429, 1.442695
    %v432 = vpow.pop %v431
    %v433 = vmul.f32 %v430, 1.442695
    %v434 = vpow.pop %v433
    %v435 = vmul.f32 %v425, %v432
    %v436 = vmul.f32 %v426, %v434
    %s437 = scalar_lea.vmem [#allocation2], 8
    %v438 = vld [vmem:[%s437] sm:$0xff]
    %v439 = vadd.f32 %v435, %v436
    %v440 = vadd.f32 %v438, %v439
    %441 = vst [vmem:[%s437] sm:$0xff] %v440
    %v442 = vld [vmem:[%s208] sm:$0xff]
    %v443 = vld [vmem:[%s208 + $0x8] sm:$0xff]
    %v444 = vand.u32 2147483647, %v442
    %v445 = vand.u32 2147483647, %v443
    %v446 = vsub.f32 0.0, %v444
    %v447 = vsub.f32 0.0, %v445
    %v448 = vmul.f32 %v446, 1.442695
    %v449 = vpow.pop %v448
    %v450 = vmul.f32 %v447, 1.442695
    %v451 = vpow.pop %v450
    %v452 = vmin.f32 %v442, 0.0
    %v453 = vmin.f32 %v443, 0.0
    %v454 = vadd.f32 %v449, 1.0
    %v455 = vadd.f32 %v451, 1.0
    %v456 = vlog2.pop %v454
    %v457 = vmul.f32 %v456, 0.6931472
    %v458 = vlog2.pop %v455
    %v459 = vmul.f32 %v458, 0.6931472
    %v460 = vsub.f32 %v452, %v457
    %v461 = vsub.f32 %v453, %v459
    %v462 = vmax.f32 %v460, -9.2103405
    %v463 = vmax.f32 %v461, -9.2103405
    %v464 = vmin.f32 %v462, -0.000100005
    %v465 = vmin.f32 %v463, -0.000100005
    %v466 = vsub.f32 %v460, %v442
    %v467 = vsub.f32 %v461, %v443
    %v468 = vmax.f32 %v466, -9.2103405
    %v469 = vmax.f32 %v467, -9.2103405
    %v470 = vmin.f32 %v468, -0.000100005
    %v471 = vmin.f32 %v469, -0.000100005
    %v472 = vmul.f32 %v470, %v384
    %v473 = vmul.f32 %v471, %v385
    %v474 = vsel %vm378, %v464, %v472
    %v475 = vsel %vm379, %v465, %v473
    %v476 = vsel %vm378, %v470, %v464
    %v477 = vsel %vm379, %v471, %v465
    %v478 = vmul.f32 %v476, 2.0
    %v479 = vmul.f32 %v477, 2.0
    %v480 = vmul.f32 %v478, 1.442695
    %v481 = vpow.pop %v480
    %v482 = vmul.f32 %v479, 1.442695
    %v483 = vpow.pop %v482
    %v484 = vmul.f32 %v474, %v481
    %v485 = vmul.f32 %v475, %v483
    %s486 = scalar_lea.vmem [#allocation2], 32
    %v487 = vld [vmem:[%s486] sm:$0xff]
    %v488 = vadd.f32 %v484, %v485
    %v489 = vadd.f32 %v487, %v488
    %490 = vst [vmem:[%s486] sm:$0xff] %v489
    %v491 = vld [vmem:[%s240] sm:$0xff]
    %v492 = vld [vmem:[%s240 + $0x8] sm:$0xff]
    %vm493 = vcmp.eq.f32.partialorder %v491, 1.0
    %vm494 = vcmp.eq.f32.partialorder %v492, 1.0
    %v495 = vsub.f32 1.0, %v491
    %v496 = vsub.f32 1.0, %v492
    %v497 = vmul.f32 %v495, %v495
    %v498 = vmul.f32 %v496, %v496
    %v499 = vmul.f32 %v497, %v497
    %v500 = vmul.f32 %v498, %v498
    %s501 = scalar_lea.vmem [#allocation2], 64
    %v502 = vld [vmem:[%s501] sm:$0xff]
    %v503 = vsel %vm493, 1.0, 0.0
    %v504 = vsel %vm494, 1.0, 0.0
    %v505 = vadd.f32 %v503, %v504
    %v506 = vadd.f32 %v502, %v505
    %507 = vst [vmem:[%s501] sm:$0xff] %v506
    %v508 = vld [vmem:[%s192] sm:$0xff]
    %v509 = vld [vmem:[%s192 + $0x8] sm:$0xff]
    %v510 = vand.u32 2147483647, %v508
    %v511 = vand.u32 2147483647, %v509
    %v512 = vsub.f32 0.0, %v510
    %v513 = vsub.f32 0.0, %v511
    %v514 = vmul.f32 %v512, 1.442695
    %v515 = vpow.pop %v514
    %v516 = vmul.f32 %v513, 1.442695
    %v517 = vpow.pop %v516
    %v518 = vmin.f32 %v508, 0.0
    %v519 = vmin.f32 %v509, 0.0
    %v520 = vadd.f32 %v515, 1.0
    %v521 = vadd.f32 %v517, 1.0
    %v522 = vlog2.pop %v520
    %v523 = vmul.f32 %v522, 0.6931472
    %v524 = vlog2.pop %v521
    %v525 = vmul.f32 %v524, 0.6931472
    %v526 = vsub.f32 %v518, %v523
    %v527 = vsub.f32 %v519, %v525
    %v528 = vmax.f32 %v526, -9.2103405
    %v529 = vmax.f32 %v527, -9.2103405
    %v530 = vmin.f32 %v528, -0.000100005
    %v531 = vmin.f32 %v529, -0.000100005
    %v532 = vsub.f32 %v526, %v508
    %v533 = vsub.f32 %v527, %v509
    %v534 = vmax.f32 %v532, -9.2103405
    %v535 = vmax.f32 %v533, -9.2103405
    %v536 = vmin.f32 %v534, -0.000100005
    %v537 = vmin.f32 %v535, -0.000100005
    %v538 = vmul.f32 %v536, %v499
    %v539 = vmul.f32 %v537, %v500
    %v540 = vsel %vm493, %v530, %v538
    %v541 = vsel %vm494, %v531, %v539
    %v542 = vsel %vm493, %v536, %v530
    %v543 = vsel %vm494, %v537, %v531
    %v544 = vmul.f32 %v542, 2.0
    %v545 = vmul.f32 %v543, 2.0
    %v546 = vmul.f32 %v544, 1.442695
    %v547 = vpow.pop %v546
    %v548 = vmul.f32 %v545, 1.442695
    %v549 = vpow.pop %v548
    %v550 = vmul.f32 %v540, %v547
    %v551 = vmul.f32 %v541, %v549
    %s552 = scalar_lea.vmem [#allocation2], 16
    %v553 = vld [vmem:[%s552] sm:$0xff]
    %v554 = vadd.f32 %v550, %v551
    %v555 = vadd.f32 %v553, %v554
    %556 = vst [vmem:[%s552] sm:$0xff] %v555
    %v557 = vld [vmem:[%s216] sm:$0xff]
    %v558 = vld [vmem:[%s216 + $0x8] sm:$0xff]
    %v559 = vand.u32 2147483647, %v557
    %v560 = vand.u32 2147483647, %v558
    %v561 = vsub.f32 0.0, %v559
    %v562 = vsub.f32 0.0, %v560
    %v563 = vmul.f32 %v561, 1.442695
    %v564 = vpow.pop %v563
    %v565 = vmul.f32 %v562, 1.442695
    %v566 = vpow.pop %v565
    %v567 = vmin.f32 %v557, 0.0
    %v568 = vmin.f32 %v558, 0.0
    %v569 = vadd.f32 %v564, 1.0
    %v570 = vadd.f32 %v566, 1.0
    %v571 = vlog2.pop %v569
    %v572 = vmul.f32 %v571, 0.6931472
    %v573 = vlog2.pop %v570
    %v574 = vmul.f32 %v573, 0.6931472
    %v575 = vsub.f32 %v567, %v572
    %v576 = vsub.f32 %v568, %v574
    %v577 = vmax.f32 %v575, -9.2103405
    %v578 = vmax.f32 %v576, -9.2103405
    %v579 = vmin.f32 %v577, -0.000100005
    %v580 = vmin.f32 %v578, -0.000100005
    %v581 = vsub.f32 %v575, %v557
    %v582 = vsub.f32 %v576, %v558
    %v583 = vmax.f32 %v581, -9.2103405
    %v584 = vmax.f32 %v582, -9.2103405
    %v585 = vmin.f32 %v583, -0.000100005
    %v586 = vmin.f32 %v584, -0.000100005
    %v587 = vmul.f32 %v585, %v499
    %v588 = vmul.f32 %v586, %v500
    %v589 = vsel %vm493, %v579, %v587
    %v590 = vsel %vm494, %v580, %v588
    %v591 = vsel %vm493, %v585, %v579
    %v592 = vsel %vm494, %v586, %v580
    %v593 = vmul.f32 %v591, 2.0
    %v594 = vmul.f32 %v592, 2.0
    %v595 = vmul.f32 %v593, 1.442695
    %v596 = vpow.pop %v595
    %v597 = vmul.f32 %v594, 1.442695
    %v598 = vpow.pop %v597
    %v599 = vmul.f32 %v589, %v596
    %v600 = vmul.f32 %v590, %v598
    %s601 = scalar_lea.vmem [#allocation2], 40
    %v602 = vld [vmem:[%s601] sm:$0xff]
    %v603 = vadd.f32 %v599, %v600
    %v604 = vadd.f32 %v602, %v603
    %605 = vst [vmem:[%s601] sm:$0xff] %v604
    %p606 = scmp.eq.s32.totalorder 0, 0
    %p607 = pnand %p243, %p606
    %p608 = pneg %p607
    // Predicated region
    $region58: #{tpu_custom_call.1} parent=1 // pred_check
      _
    $region59: #{tpu_custom_call.1} parent=1 // pred_check_branch
      %610 = sbr.rel (%p607) target = $region61
    $region60: #{tpu_custom_call.1} parent=1 // pred_region
      %v611 = vld [vmem:[%s10] sm:$0x3]
      %v612 = vld [vmem:[%s9] sm:$0x3]
      %v613 = vld [vmem:[%s9 + $0x2] sm:$0x3]
      %v614 = vld [vmem:[%s9 + $0x4] sm:$0x3]
      %v615 = vld [vmem:[%s9 + $0x6] sm:$0x3]
      %v616 = vld [vmem:[%s11] sm:$0xff]
      %v617 = vld [vmem:[%s11 + $0x8] sm:$0xff]
      %v618 = vld [vmem:[%s11 + $0x10] sm:$0xff]
      %v619 = vld [vmem:[%s11 + $0x18] sm:$0xff]
      %v620 = vld [vmem:[%s11 + $0x20] sm:$0xff]
      %v621 = vld [vmem:[%s11 + $0x28] sm:$0xff]
      %v622 = vld [vmem:[%s11 + $0x30] sm:$0xff]
      %v623 = vld [vmem:[%s11 + $0x38] sm:$0xff]
      %v624 = vld [vmem:[%s11 + $0x40] sm:$0xff]
      %v625 = vld [vmem:[%s11 + $0x48] sm:$0xff]
      %v626 = vld [vmem:[%s11 + $0x50] sm:$0xff]
      %v627 = vld [vmem:[%s11 + $0x58] sm:$0xff]
      %v628 = vld [vmem:[%s12] sm:$0xff]
      %v629 = vld [vmem:[%s12 + $0x8] sm:$0xff]
      %v630 = vld [vmem:[%s12 + $0x10] sm:$0xff]
      %v631 = vld [vmem:[%s12 + $0x18] sm:$0xff]
      %v632 = vld [vmem:[%s12 + $0x20] sm:$0xff]
      %v633 = vld [vmem:[%s12 + $0x28] sm:$0xff]
      %vm634 = vcmask 58368
      %v635 = vsel %vm634, %v611, 0.0
      %636 = vadd.xlane.f32.xlu0 %v635
      %v637 = vpop.xlane.xlu0 %636
      %v638 = vrot.slane %v637, 4
      %v639 = vadd.f32 %v637, %v638
      %v640 = vrot.slane %v639, 2
      %v641 = vadd.f32 %v639, %v640
      %v642 = vrot.slane %v641, 1
      %v643 = vadd.f32 %v641, %v642
      %s644 = vtos %v643
      %v647 = vunpack.c.l.s4 1966171168
      %v648 = vunpack.c.0.s8 %v647
      %v649 = vlaneseq
      %v650 = vshrl.u32 %v649, 7
      %v651 = vsub.s32 %v648, %v650
      %v652 = vrot.slane %v611, %v651
      %v653 = vcombine.high %v652, %v652
      %v655 = vunpack.c.l.s4 1966171168
      %v656 = vunpack.c.0.s8 %v655
      %v657 = vlaneseq
      %v658 = vshrl.u32 %v657, 7
      %v659 = vsub.s32 %v656, %v658
      %v660 = vrot.slane %v652, %v659
      %v662 = vunpack.c.l.s4 1966171168
      %v663 = vunpack.c.0.s8 %v662
      %v664 = vlaneseq
      %v665 = vshrl.u32 %v664, 7
      %v666 = vsub.s32 %v663, %v665
      %v667 = vrot.slane %v653, %v666
      %v668 = vlaneseq
      %v669 = vshrl.u32 %v668, 7
      %v670 = vsub.s32 0, %v669
      %v671 = vrot.slane %v611, %v670
      %673 = vbcast.lane.b32.xlu0 %v671, 256
      %v674 = vpop.permute.xlu0 %673
      %v675 = vlaneseq
      %v676 = vshrl.u32 %v675, 7
      %v677 = vsub.s32 1, %v676
      %v678 = vrot.slane %v611, %v677
      %680 = vbcast.lane.b32.xlu0 %v678, 256
      %v681 = vpop.permute.xlu0 %680
      %v682 = vlaneseq
      %v683 = vshrl.u32 %v682, 7
      %v684 = vsub.s32 0, %v683
      %v685 = vrot.slane %v660, %v684
      %v686 = vlaneseq
      %v687 = vshrl.u32 %v686, 7
      %v688 = vsub.s32 0, %v687
      %v689 = vrot.slane %v667, %v688
      %v692 = vmul.f32 %v685, %v674
      %v693 = vmul.f32 %v689, %v681
      %v695 = vlaneseq
      %v696 = vshrl.u32 %v695, 7
      %v697 = vsub.s32 0, %v696
      %v698 = vrot.slane %v637, %v697
      %v699 = vlaneseq
      %v700 = vshrl.u32 %v699, 7
      %v701 = vsub.s32 1, %v700
      %v702 = vrot.slane %v637, %v701
      %v705 = vsub.f32 %v698, 1.0
      %v706 = vsub.f32 %v702, 1.0
      %v707 = vmul.f32 %v705, %v698
      %v708 = vmul.f32 %v706, %v702
      %v709 = vadd.f32 %v612, %v613
      %v710 = vmul.f32 %v709, 0.5
      %v711 = vsub.f32 %v612, %v710
      %v712 = vmul.f32 %v711, %v711
      %v713 = vsub.f32 %v613, %v710
      %v714 = vmul.f32 %v713, %v713
      %v715 = vadd.f32 %v712, %v714
      %v716 = vadd.f32 %v637, 0.0001
      %v717 = vrcp.pop %v716
      %v718 = vmul.f32 %v715, %v717
      %v719 = vmul.f32 %v718, %v611
      %v720 = vsel %vm634, %v719, 0.0
      %721 = vadd.xlane.f32.xlu0 %v720
      %v722 = vpop.xlane.xlu0 %721
      %v723 = vrot.slane %v722, 4
      %v724 = vadd.f32 %v722, %v723
      %v725 = vrot.slane %v724, 2
      %v726 = vadd.f32 %v724, %v725
      %v727 = vrot.slane %v726, 1
      %v728 = vadd.f32 %v726, %v727
      %s729 = vtos %v728
      %v732 = vunpack.c.l.s4 1966171168
      %v733 = vunpack.c.0.s8 %v732
      %v734 = vlaneseq
      %v735 = vshrl.u32 %v734, 7
      %v736 = vsub.s32 %v733, %v735
      %v737 = vrot.slane %v710, %v736
      %v738 = vcombine.high %v737, %v737
      %v740 = vunpack.c.l.s4 1966171168
      %v741 = vunpack.c.0.s8 %v740
      %v742 = vlaneseq
      %v743 = vshrl.u32 %v742, 7
      %v744 = vsub.s32 %v741, %v743
      %v745 = vrot.slane %v737, %v744
      %v747 = vunpack.c.l.s4 1966171168
      %v748 = vunpack.c.0.s8 %v747
      %v749 = vlaneseq
      %v750 = vshrl.u32 %v749, 7
      %v751 = vsub.s32 %v748, %v750
      %v752 = vrot.slane %v738, %v751
      %v753 = vlaneseq
      %v754 = vshrl.u32 %v753, 7
      %v755 = vsub.s32 0, %v754
      %v756 = vrot.slane %v710, %v755
      %758 = vbcast.lane.b32.xlu0 %v756, 256
      %v759 = vpop.permute.xlu0 %758
      %v760 = vlaneseq
      %v761 = vshrl.u32 %v760, 7
      %v762 = vsub.s32 1, %v761
      %v763 = vrot.slane %v710, %v762
      %765 = vbcast.lane.b32.xlu0 %v763, 256
      %v766 = vpop.permute.xlu0 %765
      %v767 = vlaneseq
      %v768 = vshrl.u32 %v767, 7
      %v769 = vsub.s32 0, %v768
      %v770 = vrot.slane %v745, %v769
      %v771 = vlaneseq
      %v772 = vshrl.u32 %v771, 7
      %v773 = vsub.s32 0, %v772
      %v774 = vrot.slane %v752, %v773
      %v777 = vsub.f32 %v770, %v759
      %v778 = vsub.f32 %v774, %v766
      %v779 = vand.u32 2147483647, %v777
      %v780 = vand.u32 2147483647, %v778
      %v781 = vsub.f32 1.0, %v779
      %v782 = vsub.f32 1.0, %v780
      %v783 = vmax.f32 %v781, 0.0
      %v784 = vmax.f32 %v782, 0.0
      %v785 = vadd.f32 %v698, 0.0001
      %v786 = vadd.f32 %v702, 0.0001
      %v787 = vrcp.pop %v785
      %v788 = vmul.f32 1.0, %v787
      %v789 = vrcp.pop %v786
      %v790 = vmul.f32 1.0, %v789
      %v791 = vsub.f32 %v783, %v788
      %v792 = vsub.f32 %v784, %v790
      %v793 = vadd.f32 %v707, 0.0001
      %v794 = vadd.f32 %v708, 0.0001
      %v795 = vrcp.pop %v793
      %v796 = vmul.f32 %v791, %v795
      %v797 = vrcp.pop %v794
      %v798 = vmul.f32 %v792, %v797
      %v799 = vmul.f32 %v796, %v692
      %v800 = vmul.f32 %v798, %v693
      %vm801 = vcmask 64512
      %v802 = vsel %vm801, %v799, 0.0
      %v803 = vsel %vm801, %v800, 0.0
      %v804 = vadd.f32 %v802, %v803
      %805 = vadd.xlane.f32.xlu0 %v804
      %v806 = vpop.xlane.xlu0 %805
      %v807 = vrot.slane %v806, 4
      %v808 = vadd.f32 %v806, %v807
      %v809 = vrot.slane %v808, 2
      %v810 = vadd.f32 %v808, %v809
      %v811 = vrot.slane %v810, 1
      %v812 = vadd.f32 %v810, %v811
      %s813 = vtos %v812
      %v814 = vsub.f32 %v616, %v628
      %v815 = vsub.f32 %v617, %v629
      %v816 = vsub.f32 %v618, %v630
      %v817 = vsub.f32 %v619, %v631
      %v818 = vsub.f32 %v620, %v632
      %v819 = vsub.f32 %v621, %v633
      %v820 = vand.u32 2147483647, %v814
      %v821 = vand.u32 2147483647, %v815
      %v822 = vand.u32 2147483647, %v816
      %v823 = vand.u32 2147483647, %v817
      %v824 = vand.u32 2147483647, %v818
      %v825 = vand.u32 2147483647, %v819
      %vm826 = vcmp.lt.f32.partialorder %v820, 1.0
      %vm827 = vcmp.lt.f32.partialorder %v821, 1.0
      %vm828 = vcmp.lt.f32.partialorder %v822, 1.0
      %vm829 = vcmp.lt.f32.partialorder %v823, 1.0
      %vm830 = vcmp.lt.f32.partialorder %v824, 1.0
      %vm831 = vcmp.lt.f32.partialorder %v825, 1.0
      %v832 = vmul.f32 %v814, 0.5
      %v833 = vmul.f32 %v815, 0.5
      %v834 = vmul.f32 %v816, 0.5
      %v835 = vmul.f32 %v817, 0.5
      %v836 = vmul.f32 %v818, 0.5
      %v837 = vmul.f32 %v819, 0.5
      %v838 = vmul.f32 %v832, %v814
      %v839 = vmul.f32 %v833, %v815
      %v840 = vmul.f32 %v834, %v816
      %v841 = vmul.f32 %v835, %v817
      %v842 = vmul.f32 %v836, %v818
      %v843 = vmul.f32 %v837, %v819
      %v844 = vsub.f32 %v820, 0.5
      %v845 = vsub.f32 %v821, 0.5
      %v846 = vsub.f32 %v822, 0.5
      %v847 = vsub.f32 %v823, 0.5
      %v848 = vsub.f32 %v824, 0.5
      %v849 = vsub.f32 %v825, 0.5
      %v850 = vsel %vm826, %v838, %v844
      %v851 = vsel %vm827, %v839, %v845
      %v852 = vsel %vm828, %v840, %v846
      %v853 = vsel %vm829, %v841, %v847
      %v854 = vsel %vm830, %v842, %v848
      %v855 = vsel %vm831, %v843, %v849
      %v856 = vmul.f32 %v850, %v674
      %v857 = vmul.f32 %v851, %v681
      %v858 = vmul.f32 %v852, %v674
      %v859 = vmul.f32 %v853, %v681
      %v860 = vmul.f32 %v854, %v674
      %v861 = vmul.f32 %v855, %v681
      %vm862 = vcmask 15360
      %v863 = vsel %vm862, %v856, 0.0
      %v864 = vsel %vm862, %v857, 0.0
      %v865 = vadd.f32 %v863, %v864
      %v866 = vsel %vm862, %v858, 0.0
      %v867 = vadd.f32 %v865, %v866
      %v868 = vsel %vm862, %v859, 0.0
      %v869 = vadd.f32 %v867, %v868
      %v870 = vsel %vm862, %v860, 0.0
      %v871 = vadd.f32 %v869, %v870
      %v872 = vsel %vm862, %v861, 0.0
      %v873 = vadd.f32 %v871, %v872
      %874 = vadd.xlane.f32.xlu0 %v873
      %v875 = vpop.xlane.xlu0 %874
      %v876 = vrot.slane %v875, 4
      %v877 = vadd.f32 %v875, %v876
      %v878 = vrot.slane %v877, 2
      %v879 = vadd.f32 %v877, %v878
      %v880 = vrot.slane %v879, 1
      %v881 = vadd.f32 %v879, %v880
      %s882 = vtos %v881
      %s883 = sadd.f32 %s644, 0.0001
      %v884 = vstv %s883
      %v885 = vrcp.pop %v884
      %s886 = vtos %v885
      %s887 = smul.f32 %s882, %s886
      %v888 = vstv %s729
      %s889 = scalar_lea.vmem [#allocation2], 72
      %890 = vst [vmem:[%s889] sm:$0xff] %v888
      %v891 = vstv %s813
      %s892 = scalar_lea.vmem [#allocation2], 80
      %893 = vst [vmem:[%s892] sm:$0xff] %v891
      %v894 = vstv %s887
      %s895 = scalar_lea.vmem [#allocation2], 88
      %896 = vst [vmem:[%s895] sm:$0xff] %v894
      %v897 = vadd.f32 %v614, %v615
      %v898 = vmul.f32 %v897, 0.5
      %v899 = vsub.f32 %v614, %v898
      %v900 = vmul.f32 %v899, %v899
      %v901 = vsub.f32 %v615, %v898
      %v902 = vmul.f32 %v901, %v901
      %v903 = vadd.f32 %v900, %v902
      %v904 = vmul.f32 %v903, %v717
      %v905 = vmul.f32 %v904, %v611
      %v906 = vsel %vm634, %v905, 0.0
      %907 = vadd.xlane.f32.xlu0 %v906
      %v908 = vpop.xlane.xlu0 %907
      %v909 = vrot.slane %v908, 4
      %v910 = vadd.f32 %v908, %v909
      %v911 = vrot.slane %v910, 2
      %v912 = vadd.f32 %v910, %v911
      %v913 = vrot.slane %v912, 1
      %v914 = vadd.f32 %v912, %v913
      %s915 = vtos %v914
      %v918 = vunpack.c.l.s4 1966171168
      %v919 = vunpack.c.0.s8 %v918
      %v920 = vlaneseq
      %v921 = vshrl.u32 %v920, 7
      %v922 = vsub.s32 %v919, %v921
      %v923 = vrot.slane %v898, %v922
      %v924 = vcombine.high %v923, %v923
      %v926 = vunpack.c.l.s4 1966171168
      %v927 = vunpack.c.0.s8 %v926
      %v928 = vlaneseq
      %v929 = vshrl.u32 %v928, 7
      %v930 = vsub.s32 %v927, %v929
      %v931 = vrot.slane %v923, %v930
      %v933 = vunpack.c.l.s4 1966171168
      %v934 = vunpack.c.0.s8 %v933
      %v935 = vlaneseq
      %v936 = vshrl.u32 %v935, 7
      %v937 = vsub.s32 %v934, %v936
      %v938 = vrot.slane %v924, %v937
      %v939 = vlaneseq
      %v940 = vshrl.u32 %v939, 7
      %v941 = vsub.s32 0, %v940
      %v942 = vrot.slane %v898, %v941
      %944 = vbcast.lane.b32.xlu0 %v942, 256
      %v945 = vpop.permute.xlu0 %944
      %v946 = vlaneseq
      %v947 = vshrl.u32 %v946, 7
      %v948 = vsub.s32 1, %v947
      %v949 = vrot.slane %v898, %v948
      %951 = vbcast.lane.b32.xlu0 %v949, 256
      %v952 = vpop.permute.xlu0 %951
      %v953 = vlaneseq
      %v954 = vshrl.u32 %v953, 7
      %v955 = vsub.s32 0, %v954
      %v956 = vrot.slane %v931, %v955
      %v957 = vlaneseq
      %v958 = vshrl.u32 %v957, 7
      %v959 = vsub.s32 0, %v958
      %v960 = vrot.slane %v938, %v959
      %v963 = vsub.f32 %v956, %v945
      %v964 = vsub.f32 %v960, %v952
      %v965 = vand.u32 2147483647, %v963
      %v966 = vand.u32 2147483647, %v964
      %v967 = vsub.f32 1.0, %v965
      %v968 = vsub.f32 1.0, %v966
      %v969 = vmax.f32 %v967, 0.0
      %v970 = vmax.f32 %v968, 0.0
      %v971 = vsub.f32 %v969, %v788
      %v972 = vsub.f32 %v970, %v790
      %v973 = vmul.f32 %v971, %v795
      %v974 = vmul.f32 %v972, %v797
      %v975 = vmul.f32 %v973, %v692
      %v976 = vmul.f32 %v974, %v693
      %v977 = vsel %vm801, %v975, 0.0
      %v978 = vsel %vm801, %v976, 0.0
      %v979 = vadd.f32 %v977, %v978
      %980 = vadd.xlane.f32.xlu0 %v979
      %v981 = vpop.xlane.xlu0 %980
      %v982 = vrot.slane %v981, 4
      %v983 = vadd.f32 %v981, %v982
      %v984 = vrot.slane %v983, 2
      %v985 = vadd.f32 %v983, %v984
      %v986 = vrot.slane %v985, 1
      %v987 = vadd.f32 %v985, %v986
      %s988 = vtos %v987
      %v989 = vsub.f32 %v622, %v628
      %v990 = vsub.f32 %v623, %v629
      %v991 = vsub.f32 %v624, %v630
      %v992 = vsub.f32 %v625, %v631
      %v993 = vsub.f32 %v626, %v632
      %v994 = vsub.f32 %v627, %v633
      %v995 = vand.u32 2147483647, %v989
      %v996 = vand.u32 2147483647, %v990
      %v997 = vand.u32 2147483647, %v991
      %v998 = vand.u32 2147483647, %v992
      %v999 = vand.u32 2147483647, %v993
      %v1000 = vand.u32 2147483647, %v994
      %vm1001 = vcmp.lt.f32.partialorder %v995, 1.0
      %vm1002 = vcmp.lt.f32.partialorder %v996, 1.0
      %vm1003 = vcmp.lt.f32.partialorder %v997, 1.0
      %vm1004 = vcmp.lt.f32.partialorder %v998, 1.0
      %vm1005 = vcmp.lt.f32.partialorder %v999, 1.0
      %vm1006 = vcmp.lt.f32.partialorder %v1000, 1.0
      %v1007 = vmul.f32 %v989, 0.5
      %v1008 = vmul.f32 %v990, 0.5
      %v1009 = vmul.f32 %v991, 0.5
      %v1010 = vmul.f32 %v992, 0.5
      %v1011 = vmul.f32 %v993, 0.5
      %v1012 = vmul.f32 %v994, 0.5
      %v1013 = vmul.f32 %v1007, %v989
      %v1014 = vmul.f32 %v1008, %v990
      %v1015 = vmul.f32 %v1009, %v991
      %v1016 = vmul.f32 %v1010, %v992
      %v1017 = vmul.f32 %v1011, %v993
      %v1018 = vmul.f32 %v1012, %v994
      %v1019 = vsub.f32 %v995, 0.5
      %v1020 = vsub.f32 %v996, 0.5
      %v1021 = vsub.f32 %v997, 0.5
      %v1022 = vsub.f32 %v998, 0.5
      %v1023 = vsub.f32 %v999, 0.5
      %v1024 = vsub.f32 %v1000, 0.5
      %v1025 = vsel %vm1001, %v1013, %v1019
      %v1026 = vsel %vm1002, %v1014, %v1020
      %v1027 = vsel %vm1003, %v1015, %v1021
      %v1028 = vsel %vm1004, %v1016, %v1022
      %v1029 = vsel %vm1005, %v1017, %v1023
      %v1030 = vsel %vm1006, %v1018, %v1024
      %v1031 = vmul.f32 %v1025, %v674
      %v1032 = vmul.f32 %v1026, %v681
      %v1033 = vmul.f32 %v1027, %v674
      %v1034 = vmul.f32 %v1028, %v681
      %v1035 = vmul.f32 %v1029, %v674
      %v1036 = vmul.f32 %v1030, %v681
      %v1037 = vsel %vm862, %v1031, 0.0
      %v1038 = vsel %vm862, %v1032, 0.0
      %v1039 = vadd.f32 %v1037, %v1038
      %v1040 = vsel %vm862, %v1033, 0.0
      %v1041 = vadd.f32 %v1039, %v1040
      %v1042 = vsel %vm862, %v1034, 0.0
      %v1043 = vadd.f32 %v1041, %v1042
      %v1044 = vsel %vm862, %v1035, 0.0
      %v1045 = vadd.f32 %v1043, %v1044
      %v1046 = vsel %vm862, %v1036, 0.0
      %v1047 = vadd.f32 %v1045, %v1046
      %1048 = vadd.xlane.f32.xlu0 %v1047
      %v1049 = vpop.xlane.xlu0 %1048
      %v1050 = vrot.slane %v1049, 4
      %v1051 = vadd.f32 %v1049, %v1050
      %v1052 = vrot.slane %v1051, 2
      %v1053 = vadd.f32 %v1051, %v1052
      %v1054 = vrot.slane %v1053, 1
      %v1055 = vadd.f32 %v1053, %v1054
      %s1056 = vtos %v1055
      %v1057 = vstv %s883
      %v1058 = vrcp.pop %v1057
      %s1059 = vtos %v1058
      %s1060 = smul.f32 %s1056, %s1059
      %v1061 = vstv %s915
      %s1062 = scalar_lea.vmem [#allocation2], 96
      %1063 = vst [vmem:[%s1062] sm:$0xff] %v1061
      %v1064 = vstv %s988
      %s1065 = scalar_lea.vmem [#allocation2], 104
      %1066 = vst [vmem:[%s1065] sm:$0xff] %v1064
      %v1067 = vstv %s1060
      %s1068 = scalar_lea.vmem [#allocation2], 112
      %1069 = vst [vmem:[%s1068] sm:$0xff] %v1067
    $region61: #{tpu_custom_call.1} parent=1 // pred_fallthru
      _
    // Predicated region
    $region62: #{tpu_custom_call.1} parent=1 // pred_check
      _
    $region63: #{tpu_custom_call.1} parent=1 // pred_check_branch
      %1071 = sbr.rel (0) target = $region65
    $region64: #{tpu_custom_call.1} parent=1 // pred_region
      %s1073 = ssub.s32 1920, 1920
      %1074 = vsyncadd [#allocation3], %s1073
      %s1075 = sshll.u32 [#allocation2], 4
      %s1076 = int_to_ptr.vmem [resolvable:$true] %s1075
      %1081 = dma.vmem_to_hbm [thread:$0]  %s1076, 1920, %s13, [#allocation3], 128, 128, 8
    $region65: #{tpu_custom_call.1} parent=1 // pred_fallthru
      _
    // Predicated region
    $region66: #{tpu_custom_call.1} parent=1 // pred_check
      _
    $region67: #{tpu_custom_call.1} parent=1 // pred_check_branch
      %1083 = sbr.rel (0) target = $region69
    $region68: #{tpu_custom_call.1} parent=1 // pred_region
      %1084 = dma.done [#allocation3], 1920
    $region69: #{tpu_custom_call.1} parent=1 // pred_fallthru
      _
    %1085 = vsyncpa [#allocation3], 1

</llo_original>
